<compile_context>
chip_gen: v6e
topology: v6e:2x2x1
jax: 0.10.0
libtpu: 0.0.40
codegen_flags: <defaults>
</compile_context>

<pallas_src>
import functools

import jax
import jax.numpy as jnp
from jax.experimental import pallas as pl
from jax.experimental.pallas import tpu as pltpu

EPS = 1e-5  # RMSNorm eps from TransformerBlock.__init__


def _dot(a, b):
    return jnp.dot(a, b, preferred_element_type=jnp.float32)


def _dot_nt(a, b):
    # a (M, K), b (N, K) -> (M, N); contraction on the last dims (no explicit .T).
    return jax.lax.dot_general(a, b, (((1,), (1,)), ((), ())),
                               preferred_element_type=jnp.float32)


# ----------------------------------------------------------------------------
# Fused kernel, grid = (batch,).  Per batch element:
#   xn = RMSNorm(x); [q|k|v] = xn @ Wqkv (full width);
#   per head: rope -> masked softmax -> PV;  h = x + concat(o_h) @ Wo;
#   out = h + SwiGLU(RMSNorm(h)).
# ----------------------------------------------------------------------------
def _block_kernel(nh, hd, x_ref, wqkv_ref, wo_ref, w1_ref, w2_ref, w3_ref,
                  ag_ref, fg_ref, cos_ref, sin_ref, idc_ref, idr_ref, out_ref):
    bf16 = jnp.bfloat16
    H = nh * hd
    half = hd // 2

    # ---- attention_norm (RMSNorm, f32) --------------------------------------
    x = x_ref[0].astype(jnp.float32)                        # (P, H)
    ms = jnp.mean(x * x, axis=-1, keepdims=True)
    xn = (x * jax.lax.rsqrt(ms + EPS) * ag_ref[...]).astype(bf16)

    # ---- fused full-width QKV projection: one (P,H)@(H,3H) MXU pass ---------
    qkv = _dot(xn, wqkv_ref[...])                           # (P, 3H) f32

    cos = cos_ref[...]                                      # (P, hd/2) f32
    sin = sin_ref[...]
    same_img = idc_ref[...] == idr_ref[...]                 # (P, P) block-diag mask

    def rope(t):
        # t columns are [even | odd] per head; complex rotation in that basis.
        e, o = t[:, :half], t[:, half:]
        return jnp.concatenate([e * cos - o * sin, e * sin + o * cos], axis=-1)

    outs = []
    for n in range(nh):                                     # static unroll over heads
        q = qkv[:, n * hd:(n + 1) * hd]                     # pre-scaled by 1/sqrt(hd)
        k = qkv[:, H + n * hd:H + (n + 1) * hd]
        v = qkv[:, 2 * H + n * hd:2 * H + (n + 1) * hd]
        q = rope(q)
        k = rope(k)

        # scores + mask + softmax (f32); exp could be bf16 on v6e/v7x (not v5e).
        s = _dot_nt(q.astype(bf16), k.astype(bf16))         # (P, P) f32, K=hd
        s = jnp.where(same_img, s, -1e9)
        s = s - jnp.max(s, axis=-1, keepdims=True)
        p = jnp.exp(s)
        denom = jnp.sum(p, axis=-1, keepdims=True)
        o = _dot(p.astype(bf16), v.astype(bf16))            # (P, hd) f32
        outs.append((o * pl.reciprocal(denom, approx=True)).astype(bf16))

    # ---- single full-width wo matmul on the head-concatenated output --------
    o_cat = jnp.concatenate(outs, axis=-1)                  # (P, H) bf16
    h = x + _dot(o_cat, wo_ref[...])                        # residual, f32

    # ---- ffn_norm + SwiGLU FFN + second residual -----------------------------
    ms = jnp.mean(h * h, axis=-1, keepdims=True)
    hn = (h * jax.lax.rsqrt(ms + EPS) * fg_ref[...]).astype(bf16)
    a = _dot(hn, w1_ref[...])
    c = _dot(hn, w3_ref[...])
    g = (a * jax.nn.sigmoid(a) * c).astype(bf16)            # SiLU gate
    out_ref[0] = h + _dot(g, w2_ref[...])


# ----------------------------------------------------------------------------
# Wrapper: offline weight re-layout (fused head-major QKV with [even|odd] RoPE
# split and folded 1/sqrt(hd), bf16) and the pallas_call.
# ----------------------------------------------------------------------------
def transformer_block(x, img_ids, cos_hd, sin_hd, params):
    B, P, H = x.shape
    nh = int(params["n_heads"])
    hd = H // nh
    I = params["w1"].shape[1]
    bf16 = jnp.bfloat16

    def perm_eo(w, scale=1.0):
        # (H, H) with per-head interleaved (even, odd) output columns ->
        # head-major [even-half | odd-half] layout, same shape.
        w_r = w.reshape(H, nh, hd)
        w_eo = jnp.concatenate([w_r[..., 0::2], w_r[..., 1::2]], axis=-1)
        return (scale * w_eo).reshape(H, H)

    wq_p = perm_eo(params["wq"], 1.0 / (hd ** 0.5))   # fold 1/sqrt(hd) into q
    wk_p = perm_eo(params["wk"])
    wqkv = jnp.concatenate([wq_p, wk_p, params["wv"]], axis=1).astype(bf16)  # (H, 3H)
    wo = params["wo"].astype(bf16)
    w1 = params["w1"].astype(bf16)
    w2 = params["w2"].astype(bf16)
    w3 = params["w3"].astype(bf16)
    attn_g = params["attn_norm"].astype(jnp.float32).reshape(1, H)
    ffn_g = params["ffn_norm"].astype(jnp.float32).reshape(1, H)
    idc = img_ids.astype(jnp.int32)[:, None]          # (P, 1)
    idr = img_ids.astype(jnp.int32)[None, :]          # (1, P)
    cos_hd = cos_hd.astype(jnp.float32)               # (P, hd/2)
    sin_hd = sin_hd.astype(jnp.float32)

    def full(shape):
        return pl.BlockSpec(shape, lambda b: (0,) * len(shape))

    flops = B * (2 * P * H * 3 * H      # fused QKV projection
                 + 2 * P * H * H        # wo
                 + 4 * P * P * H        # scores + PV over all heads
                 + 6 * P * H * I)       # SwiGLU FFN
    transc = B * (nh * P * P + P * I)   # softmax exp + SiLU sigmoid
    bytes_acc = (x.size * 2 + B * P * H * 4 +
                 2 * (wqkv.size + wo.size + w1.size + w2.size + w3.size) +
                 4 * (attn_g.size + ffn_g.size + cos_hd.size + sin_hd.size +
                      idc.size + idr.size))

    out = pl.pallas_call(
        functools.partial(_block_kernel, nh, hd),
        out_shape=jax.ShapeDtypeStruct((B, P, H), jnp.float32),
        grid=(B,),
        in_specs=[pl.BlockSpec((1, P, H), lambda b: (b, 0, 0)),
                  full((H, 3 * H)), full((H, H)),
                  full((H, I)), full((I, H)), full((H, I)),
                  full((1, H)), full((1, H)),
                  full((P, hd // 2)), full((P, hd // 2)),
                  full((P, 1)), full((1, P))],
        out_specs=pl.BlockSpec((1, P, H), lambda b: (b, 0, 0)),
        compiler_params=pltpu.CompilerParams(
            dimension_semantics=("parallel",),
            # sized with headroom for the toy working set; re-derive for real shapes
            vmem_limit_bytes=64 * 1024 * 1024),
        cost_estimate=pl.CostEstimate(flops=int(flops), transcendentals=int(transc),
                                      bytes_accessed=int(bytes_acc)),
    )(x.astype(bf16), wqkv, wo, w1, w2, w3,
      attn_g, ffn_g, cos_hd, sin_hd, idc, idr)
    return out


# ----------------------------------------------------------------------------
# Pure-JAX f32 reference (mirrors the torch module, incl. complex RoPE)
# ----------------------------------------------------------------------------
def reference(x, mask, freqs_cis, params):
    def rms(v, w):
        return v * jax.lax.rsqrt(jnp.mean(v * v, -1, keepdims=True) + EPS) * w

    B, P, H = x.shape
    nh = params["n_heads"]
    hd = H // nh

    xn = rms(x, params["attn_norm"][0])
    q = (xn @ params["wq"]).reshape(B, P, nh, hd)
    k = (xn @ params["wk"]).reshape(B, P, nh, hd)
    v = (xn @ params["wv"]).reshape(B, P, nh, hd)

    qc = q.reshape(B, P, nh, hd // 2, 2)
    kc = k.reshape(B, P, nh, hd // 2, 2)
    qc = qc[..., 0] + 1j * qc[..., 1]
    kc = kc[..., 0] + 1j * kc[..., 1]
    f = freqs_cis[None, :, None, :]
    qr, kr = qc * f, kc * f
    q = jnp.stack([qr.real, qr.imag], -1).reshape(B, P, nh, hd)
    k = jnp.stack([kr.real, kr.imag], -1).reshape(B, P, nh, hd)

    qh = q.transpose(0, 2, 1, 3)
    kh = k.transpose(0, 2, 1, 3)
    vh = v.transpose(0, 2, 1, 3)
    s = jnp.einsum("bhqd,bhkd->bhqk", qh, kh) / jnp.sqrt(hd) + mask[None, None]
    p = jax.nn.softmax(s, -1)
    o = jnp.einsum("bhqk,bhkd->bhqd", p, vh).transpose(0, 2, 1, 3).reshape(B, P, H)

    h = x + o @ params["wo"]
    hn = rms(h, params["ffn_norm"][0])
    a = hn @ params["w1"]
    b = hn @ params["w3"]
    return h + (jax.nn.silu(a) * b) @ params["w2"]


if __name__ == "__main__":
    # VisionEncoderArgs-equivalent small config
    B, P = 2, 8                 # batch, patches (seq)
    H, NH = 32, 2               # hidden_size, num_attention_heads
    HD = H // NH                # head_dim = 16
    I = 64                      # intermediate_size
    THETA = 10000.0             # rope_theta

    key = jax.random.PRNGKey(0)
    ks = jax.random.split(key, 11)
    scale = 0.1
    params = {
        "n_heads": NH,
        "wq": scale * jax.random.normal(ks[0], (H, H), jnp.float32),
        "wk": scale * jax.random.normal(ks[1], (H, H), jnp.float32),
        "wv": scale * jax.random.normal(ks[2], (H, H), jnp.float32),
        "wo": scale * jax.random.normal(ks[3], (H, H), jnp.float32),
        "w1": scale * jax.random.normal(ks[4], (H, I), jnp.float32),
        "w2": scale * jax.random.normal(ks[5], (I, H), jnp.float32),
        "w3": scale * jax.random.normal(ks[6], (H, I), jnp.float32),
        "attn_norm": 1.0 + 0.1 * jax.random.normal(ks[8], (1, H), jnp.float32),
        "ffn_norm": 1.0 + 0.1 * jax.random.normal(ks[9], (1, H), jnp.float32),
    }

    x = jax.random.normal(ks[7], (B, P, H), jnp.float32)

    # rotary tables: freqs_cis (P, HD/2) complex for the reference,
    # plus real cos/sin (P, HD/2) for the kernel (shared across heads).
    inv_freq = 1.0 / (THETA ** (jnp.arange(0, HD, 2, dtype=jnp.float32) / HD))
    angles = jnp.arange(P, dtype=jnp.float32)[:, None] * inv_freq[None, :]   # (P, HD/2)
    freqs_cis = jnp.exp(1j * angles.astype(jnp.complex64))
    cos_hd = jnp.cos(angles)
    sin_hd = jnp.sin(angles)

    # per-patch image ids: two "images" of 4 patches each -> block-diagonal mask
    img_ids = jnp.repeat(jnp.arange(2, dtype=jnp.int32), P // 2)             # (P,)
    mask = jnp.where(img_ids[:, None] == img_ids[None, :], 0.0, -1e9).astype(jnp.float32)

    out = transformer_block(x, img_ids, cos_hd, sin_hd, params)
    out = jax.block_until_ready(out)

    ref = reference(x, mask, freqs_cis, params)
    assert out.shape == (B, P, H)
    err = float(jnp.max(jnp.abs(out - ref)))
    # bf16 x / bf16 MXU matmuls / approx softmax reciprocal vs f32 reference:
    # documented tolerance, do not tighten.
    assert jnp.allclose(out, ref, atol=2e-2, rtol=2e-2), err

    print("KERNEL_OK")
</pallas_src>

<mosaic_0001>
module attributes {stable_mosaic.version = 11 : i64} {
  func.func @_block_kernel(%arg0: i32, %arg1: memref<1x8x32xbf16, #tpu.memory_space<vmem>>, %arg2: memref<32x96xbf16, #tpu.memory_space<vmem>>, %arg3: memref<32x32xbf16, #tpu.memory_space<vmem>>, %arg4: memref<32x64xbf16, #tpu.memory_space<vmem>>, %arg5: memref<64x32xbf16, #tpu.memory_space<vmem>>, %arg6: memref<32x64xbf16, #tpu.memory_space<vmem>>, %arg7: memref<1x32xf32, #tpu.memory_space<vmem>>, %arg8: memref<1x32xf32, #tpu.memory_space<vmem>>, %arg9: memref<8x8xf32, #tpu.memory_space<vmem>>, %arg10: memref<8x8xf32, #tpu.memory_space<vmem>>, %arg11: memref<8x1xi32, #tpu.memory_space<vmem>>, %arg12: memref<1x8xi32, #tpu.memory_space<vmem>>, %arg13: memref<1x8x32xf32, #tpu.memory_space<vmem>>) attributes {dimension_semantics = [#tpu.dimension_semantics<parallel>], iteration_bounds = array<i64: 2>, scalar_prefetch = 0 : i64, scratch_operands = 0 : i64, tpu.core_type = #tpu.core_type<tc>, window_params = [{transform_indices = @transform_0, window_bounds = array<i64: 1, 8, 32>}, {pipeline_mode = #tpu.pipeline_mode<synchronous>, transform_indices = @transform_1, window_bounds = array<i64: 32, 96>}, {pipeline_mode = #tpu.pipeline_mode<synchronous>, transform_indices = @transform_2, window_bounds = array<i64: 32, 32>}, {pipeline_mode = #tpu.pipeline_mode<synchronous>, transform_indices = @transform_3, window_bounds = array<i64: 32, 64>}, {pipeline_mode = #tpu.pipeline_mode<synchronous>, transform_indices = @transform_4, window_bounds = array<i64: 64, 32>}, {pipeline_mode = #tpu.pipeline_mode<synchronous>, transform_indices = @transform_5, window_bounds = array<i64: 32, 64>}, {pipeline_mode = #tpu.pipeline_mode<synchronous>, transform_indices = @transform_6, window_bounds = array<i64: 1, 32>}, {pipeline_mode = #tpu.pipeline_mode<synchronous>, transform_indices = @transform_7, window_bounds = array<i64: 1, 32>}, {pipeline_mode = #tpu.pipeline_mode<synchronous>, transform_indices = @transform_8, window_bounds = array<i64: 8, 8>}, {pipeline_mode = #tpu.pipeline_mode<synchronous>, transform_indices = @transform_9, window_bounds = array<i64: 8, 8>}, {pipeline_mode = #tpu.pipeline_mode<synchronous>, transform_indices = @transform_10, window_bounds = array<i64: 8, 1>}, {pipeline_mode = #tpu.pipeline_mode<synchronous>, transform_indices = @transform_11, window_bounds = array<i64: 1, 8>}, {transform_indices = @transform_12, window_bounds = array<i64: 1, 8, 32>}]} {
    %c0 = arith.constant 0 : index
    %c0_0 = arith.constant 0 : index
    %c0_1 = arith.constant 0 : index
    %0 = vector.load %arg1[%c0, %c0_0, %c0_1] : memref<1x8x32xbf16, #tpu.memory_space<vmem>>, vector<1x8x32xbf16>
    %1 = vector.shape_cast %0 : vector<1x8x32xbf16> to vector<8x32xbf16>
    %2 = arith.extf %1 : vector<8x32xbf16> to vector<8x32xf32>
    %3 = arith.mulf %2, %2 : vector<8x32xf32>
    %cst = arith.constant dense<0.000000e+00> : vector<8xf32>
    %4 = vector.multi_reduction <add>, %3, %cst [1] : vector<8x32xf32> to vector<8xf32>
    %5 = vector.shape_cast %4 : vector<8xf32> to vector<8x1xf32>
    %cst_2 = arith.constant 3.200000e+01 : f32
    %6 = vector.broadcast %cst_2 : f32 to vector<8x1xf32>
    %7 = arith.divf %5, %6 : vector<8x1xf32>
    %cst_3 = arith.constant 9.99999974E-6 : f32
    %8 = vector.broadcast %cst_3 : f32 to vector<8x1xf32>
    %9 = arith.addf %7, %8 : vector<8x1xf32>
    %10 = math.rsqrt %9 : vector<8x1xf32>
    %11 = vector.broadcast %10 : vector<8x1xf32> to vector<8x32xf32>
    %12 = arith.mulf %2, %11 : vector<8x32xf32>
    %c0_4 = arith.constant 0 : index
    %c0_5 = arith.constant 0 : index
    %13 = vector.load %arg7[%c0_4, %c0_5] : memref<1x32xf32, #tpu.memory_space<vmem>>, vector<1x32xf32>
    %14 = vector.broadcast %13 : vector<1x32xf32> to vector<8x32xf32>
    %15 = arith.mulf %12, %14 : vector<8x32xf32>
    %16 = arith.truncf %15 : vector<8x32xf32> to vector<8x32xbf16>
    %c0_6 = arith.constant 0 : index
    %c0_7 = arith.constant 0 : index
    %17 = vector.load %arg2[%c0_6, %c0_7] : memref<32x96xbf16, #tpu.memory_space<vmem>>, vector<32x96xbf16>
    %cst_8 = arith.constant dense<0.000000e+00> : vector<8x96xf32>
    %18 = tpu.matmul %16, %17, %cst_8 {dimension_numbers = #tpu.dot_dimension_numbers<[1], [0], [0], [1], [0, 0, 1, 1], [], []>} : vector<8x32xbf16>, vector<32x96xbf16>, vector<8x96xf32> -> vector<8x96xf32>
    %c0_9 = arith.constant 0 : index
    %c0_10 = arith.constant 0 : index
    %19 = vector.load %arg9[%c0_9, %c0_10] : memref<8x8xf32, #tpu.memory_space<vmem>>, vector<8x8xf32>
    %c0_11 = arith.constant 0 : index
    %c0_12 = arith.constant 0 : index
    %20 = vector.load %arg10[%c0_11, %c0_12] : memref<8x8xf32, #tpu.memory_space<vmem>>, vector<8x8xf32>
    %c0_13 = arith.constant 0 : index
    %c0_14 = arith.constant 0 : index
    %21 = vector.load %arg11[%c0_13, %c0_14] : memref<8x1xi32, #tpu.memory_space<vmem>>, vector<8x1xi32>
    %c0_15 = arith.constant 0 : index
    %c0_16 = arith.constant 0 : index
    %22 = vector.load %arg12[%c0_15, %c0_16] : memref<1x8xi32, #tpu.memory_space<vmem>>, vector<1x8xi32>
    %23 = vector.broadcast %21 : vector<8x1xi32> to vector<8x8xi32>
    %24 = vector.broadcast %22 : vector<1x8xi32> to vector<8x8xi32>
    %25 = arith.cmpi eq, %23, %24 : vector<8x8xi32>
    %26 = vector.extract_strided_slice %18 {offsets = [0, 0], sizes = [8, 16], strides = [1, 1]} : vector<8x96xf32> to vector<8x16xf32>
    %27 = vector.extract_strided_slice %18 {offsets = [0, 32], sizes = [8, 16], strides = [1, 1]} : vector<8x96xf32> to vector<8x16xf32>
    %28 = vector.extract_strided_slice %18 {offsets = [0, 64], sizes = [8, 16], strides = [1, 1]} : vector<8x96xf32> to vector<8x16xf32>
    %29 = vector.extract_strided_slice %26 {offsets = [0, 0], sizes = [8, 8], strides = [1, 1]} : vector<8x16xf32> to vector<8x8xf32>
    %30 = vector.extract_strided_slice %26 {offsets = [0, 8], sizes = [8, 8], strides = [1, 1]} : vector<8x16xf32> to vector<8x8xf32>
    %31 = arith.mulf %29, %19 : vector<8x8xf32>
    %32 = arith.mulf %30, %20 : vector<8x8xf32>
    %33 = arith.subf %31, %32 : vector<8x8xf32>
    %34 = arith.mulf %29, %20 : vector<8x8xf32>
    %35 = arith.mulf %30, %19 : vector<8x8xf32>
    %36 = arith.addf %34, %35 : vector<8x8xf32>
    %37 = tpu.concatenate %33, %36 in 1 : vector<8x8xf32>, vector<8x8xf32> -> vector<8x16xf32>
    %38 = vector.extract_strided_slice %27 {offsets = [0, 0], sizes = [8, 8], strides = [1, 1]} : vector<8x16xf32> to vector<8x8xf32>
    %39 = vector.extract_strided_slice %27 {offsets = [0, 8], sizes = [8, 8], strides = [1, 1]} : vector<8x16xf32> to vector<8x8xf32>
    %40 = arith.mulf %38, %19 : vector<8x8xf32>
    %41 = arith.mulf %39, %20 : vector<8x8xf32>
    %42 = arith.subf %40, %41 : vector<8x8xf32>
    %43 = arith.mulf %38, %20 : vector<8x8xf32>
    %44 = arith.mulf %39, %19 : vector<8x8xf32>
    %45 = arith.addf %43, %44 : vector<8x8xf32>
    %46 = tpu.concatenate %42, %45 in 1 : vector<8x8xf32>, vector<8x8xf32> -> vector<8x16xf32>
    %47 = arith.truncf %37 : vector<8x16xf32> to vector<8x16xbf16>
    %48 = arith.truncf %46 : vector<8x16xf32> to vector<8x16xbf16>
    %cst_17 = arith.constant dense<0.000000e+00> : vector<8x8xf32>
    %49 = tpu.matmul %47, %48, %cst_17 {dimension_numbers = #tpu.dot_dimension_numbers<[1], [1], [0], [0], [0, 0, 1, 0], [], []>} : vector<8x16xbf16>, vector<8x16xbf16>, vector<8x8xf32> -> vector<8x8xf32>
    %cst_18 = arith.constant -1.000000e+09 : f32
    %50 = vector.broadcast %cst_18 : f32 to vector<8x8xf32>
    %51 = arith.select %25, %49, %50 : vector<8x8xi1>, vector<8x8xf32>
    %cst_19 = arith.constant dense<0xFF800000> : vector<8xf32>
    %52 = vector.multi_reduction <maximumf>, %51, %cst_19 [1] : vector<8x8xf32> to vector<8xf32>
    %53 = vector.shape_cast %52 : vector<8xf32> to vector<8x1xf32>
    %54 = vector.broadcast %53 : vector<8x1xf32> to vector<8x8xf32>
    %55 = arith.subf %51, %54 : vector<8x8xf32>
    %56 = math.exp %55 : vector<8x8xf32>
    %cst_20 = arith.constant dense<0.000000e+00> : vector<8xf32>
    %57 = vector.multi_reduction <add>, %56, %cst_20 [1] : vector<8x8xf32> to vector<8xf32>
    %58 = vector.shape_cast %57 : vector<8xf32> to vector<8x1xf32>
    %59 = arith.truncf %56 : vector<8x8xf32> to vector<8x8xbf16>
    %60 = arith.truncf %28 : vector<8x16xf32> to vector<8x16xbf16>
    %cst_21 = arith.constant dense<0.000000e+00> : vector<8x16xf32>
    %61 = tpu.matmul %59, %60, %cst_21 {dimension_numbers = #tpu.dot_dimension_numbers<[1], [0], [0], [1], [0, 0, 1, 1], [], []>} : vector<8x8xbf16>, vector<8x16xbf16>, vector<8x16xf32> -> vector<8x16xf32>
    %62 = tpu.reciprocal %58 {approx = true} : vector<8x1xf32> -> vector<8x1xf32>
    %63 = vector.broadcast %62 : vector<8x1xf32> to vector<8x16xf32>
    %64 = arith.mulf %61, %63 : vector<8x16xf32>
    %65 = arith.truncf %64 : vector<8x16xf32> to vector<8x16xbf16>
    %66 = vector.extract_strided_slice %18 {offsets = [0, 16], sizes = [8, 16], strides = [1, 1]} : vector<8x96xf32> to vector<8x16xf32>
    %67 = vector.extract_strided_slice %18 {offsets = [0, 48], sizes = [8, 16], strides = [1, 1]} : vector<8x96xf32> to vector<8x16xf32>
    %68 = vector.extract_strided_slice %18 {offsets = [0, 80], sizes = [8, 16], strides = [1, 1]} : vector<8x96xf32> to vector<8x16xf32>
    %69 = vector.extract_strided_slice %66 {offsets = [0, 0], sizes = [8, 8], strides = [1, 1]} : vector<8x16xf32> to vector<8x8xf32>
    %70 = vector.extract_strided_slice %66 {offsets = [0, 8], sizes = [8, 8], strides = [1, 1]} : vector<8x16xf32> to vector<8x8xf32>
    %71 = arith.mulf %69, %19 : vector<8x8xf32>
    %72 = arith.mulf %70, %20 : vector<8x8xf32>
    %73 = arith.subf %71, %72 : vector<8x8xf32>
    %74 = arith.mulf %69, %20 : vector<8x8xf32>
    %75 = arith.mulf %70, %19 : vector<8x8xf32>
    %76 = arith.addf %74, %75 : vector<8x8xf32>
    %77 = tpu.concatenate %73, %76 in 1 : vector<8x8xf32>, vector<8x8xf32> -> vector<8x16xf32>
    %78 = vector.extract_strided_slice %67 {offsets = [0, 0], sizes = [8, 8], strides = [1, 1]} : vector<8x16xf32> to vector<8x8xf32>
    %79 = vector.extract_strided_slice %67 {offsets = [0, 8], sizes = [8, 8], strides = [1, 1]} : vector<8x16xf32> to vector<8x8xf32>
    %80 = arith.mulf %78, %19 : vector<8x8xf32>
    %81 = arith.mulf %79, %20 : vector<8x8xf32>
    %82 = arith.subf %80, %81 : vector<8x8xf32>
    %83 = arith.mulf %78, %20 : vector<8x8xf32>
    %84 = arith.mulf %79, %19 : vector<8x8xf32>
    %85 = arith.addf %83, %84 : vector<8x8xf32>
    %86 = tpu.concatenate %82, %85 in 1 : vector<8x8xf32>, vector<8x8xf32> -> vector<8x16xf32>
    %87 = arith.truncf %77 : vector<8x16xf32> to vector<8x16xbf16>
    %88 = arith.truncf %86 : vector<8x16xf32> to vector<8x16xbf16>
    %cst_22 = arith.constant dense<0.000000e+00> : vector<8x8xf32>
    %89 = tpu.matmul %87, %88, %cst_22 {dimension_numbers = #tpu.dot_dimension_numbers<[1], [1], [0], [0], [0, 0, 1, 0], [], []>} : vector<8x16xbf16>, vector<8x16xbf16>, vector<8x8xf32> -> vector<8x8xf32>
    %cst_23 = arith.constant -1.000000e+09 : f32
    %90 = vector.broadcast %cst_23 : f32 to vector<8x8xf32>
    %91 = arith.select %25, %89, %90 : vector<8x8xi1>, vector<8x8xf32>
    %cst_24 = arith.constant dense<0xFF800000> : vector<8xf32>
    %92 = vector.multi_reduction <maximumf>, %91, %cst_24 [1] : vector<8x8xf32> to vector<8xf32>
    %93 = vector.shape_cast %92 : vector<8xf32> to vector<8x1xf32>
    %94 = vector.broadcast %93 : vector<8x1xf32> to vector<8x8xf32>
    %95 = arith.subf %91, %94 : vector<8x8xf32>
    %96 = math.exp %95 : vector<8x8xf32>
    %cst_25 = arith.constant dense<0.000000e+00> : vector<8xf32>
    %97 = vector.multi_reduction <add>, %96, %cst_25 [1] : vector<8x8xf32> to vector<8xf32>
    %98 = vector.shape_cast %97 : vector<8xf32> to vector<8x1xf32>
    %99 = arith.truncf %96 : vector<8x8xf32> to vector<8x8xbf16>
    %100 = arith.truncf %68 : vector<8x16xf32> to vector<8x16xbf16>
    %cst_26 = arith.constant dense<0.000000e+00> : vector<8x16xf32>
    %101 = tpu.matmul %99, %100, %cst_26 {dimension_numbers = #tpu.dot_dimension_numbers<[1], [0], [0], [1], [0, 0, 1, 1], [], []>} : vector<8x8xbf16>, vector<8x16xbf16>, vector<8x16xf32> -> vector<8x16xf32>
    %102 = tpu.reciprocal %98 {approx = true} : vector<8x1xf32> -> vector<8x1xf32>
    %103 = vector.broadcast %102 : vector<8x1xf32> to vector<8x16xf32>
    %104 = arith.mulf %101, %103 : vector<8x16xf32>
    %105 = arith.truncf %104 : vector<8x16xf32> to vector<8x16xbf16>
    %106 = tpu.concatenate %65, %105 in 1 : vector<8x16xbf16>, vector<8x16xbf16> -> vector<8x32xbf16>
    %c0_27 = arith.constant 0 : index
    %c0_28 = arith.constant 0 : index
    %107 = vector.load %arg3[%c0_27, %c0_28] : memref<32x32xbf16, #tpu.memory_space<vmem>>, vector<32x32xbf16>
    %cst_29 = arith.constant dense<0.000000e+00> : vector<8x32xf32>
    %108 = tpu.matmul %106, %107, %cst_29 {dimension_numbers = #tpu.dot_dimension_numbers<[1], [0], [0], [1], [0, 0, 1, 1], [], []>} : vector<8x32xbf16>, vector<32x32xbf16>, vector<8x32xf32> -> vector<8x32xf32>
    %109 = arith.addf %2, %108 : vector<8x32xf32>
    %110 = arith.mulf %109, %109 : vector<8x32xf32>
    %cst_30 = arith.constant dense<0.000000e+00> : vector<8xf32>
    %111 = vector.multi_reduction <add>, %110, %cst_30 [1] : vector<8x32xf32> to vector<8xf32>
    %112 = vector.shape_cast %111 : vector<8xf32> to vector<8x1xf32>
    %cst_31 = arith.constant 3.200000e+01 : f32
    %113 = vector.broadcast %cst_31 : f32 to vector<8x1xf32>
    %114 = arith.divf %112, %113 : vector<8x1xf32>
    %cst_32 = arith.constant 9.99999974E-6 : f32
    %115 = vector.broadcast %cst_32 : f32 to vector<8x1xf32>
    %116 = arith.addf %114, %115 : vector<8x1xf32>
    %117 = math.rsqrt %116 : vector<8x1xf32>
    %118 = vector.broadcast %117 : vector<8x1xf32> to vector<8x32xf32>
    %119 = arith.mulf %109, %118 : vector<8x32xf32>
    %c0_33 = arith.constant 0 : index
    %c0_34 = arith.constant 0 : index
    %120 = vector.load %arg8[%c0_33, %c0_34] : memref<1x32xf32, #tpu.memory_space<vmem>>, vector<1x32xf32>
    %121 = vector.broadcast %120 : vector<1x32xf32> to vector<8x32xf32>
    %122 = arith.mulf %119, %121 : vector<8x32xf32>
    %123 = arith.truncf %122 : vector<8x32xf32> to vector<8x32xbf16>
    %c0_35 = arith.constant 0 : index
    %c0_36 = arith.constant 0 : index
    %124 = vector.load %arg4[%c0_35, %c0_36] : memref<32x64xbf16, #tpu.memory_space<vmem>>, vector<32x64xbf16>
    %cst_37 = arith.constant dense<0.000000e+00> : vector<8x64xf32>
    %125 = tpu.matmul %123, %124, %cst_37 {dimension_numbers = #tpu.dot_dimension_numbers<[1], [0], [0], [1], [0, 0, 1, 1], [], []>} : vector<8x32xbf16>, vector<32x64xbf16>, vector<8x64xf32> -> vector<8x64xf32>
    %c0_38 = arith.constant 0 : index
    %c0_39 = arith.constant 0 : index
    %126 = vector.load %arg6[%c0_38, %c0_39] : memref<32x64xbf16, #tpu.memory_space<vmem>>, vector<32x64xbf16>
    %cst_40 = arith.constant dense<0.000000e+00> : vector<8x64xf32>
    %127 = tpu.matmul %123, %126, %cst_40 {dimension_numbers = #tpu.dot_dimension_numbers<[1], [0], [0], [1], [0, 0, 1, 1], [], []>} : vector<8x32xbf16>, vector<32x64xbf16>, vector<8x64xf32> -> vector<8x64xf32>
    %128 = arith.negf %125 : vector<8x64xf32>
    %129 = math.exp %128 : vector<8x64xf32>
    %cst_41 = arith.constant 1.000000e+00 : f32
    %130 = vector.broadcast %cst_41 : f32 to vector<8x64xf32>
    %131 = arith.addf %130, %129 : vector<8x64xf32>
    %132 = arith.divf %130, %131 : vector<8x64xf32>
    %133 = arith.mulf %125, %132 : vector<8x64xf32>
    %134 = arith.mulf %133, %127 : vector<8x64xf32>
    %135 = arith.truncf %134 : vector<8x64xf32> to vector<8x64xbf16>
    %c0_42 = arith.constant 0 : index
    %c0_43 = arith.constant 0 : index
    %136 = vector.load %arg5[%c0_42, %c0_43] : memref<64x32xbf16, #tpu.memory_space<vmem>>, vector<64x32xbf16>
    %cst_44 = arith.constant dense<0.000000e+00> : vector<8x32xf32>
    %137 = tpu.matmul %135, %136, %cst_44 {dimension_numbers = #tpu.dot_dimension_numbers<[1], [0], [0], [1], [0, 0, 1, 1], [], []>} : vector<8x64xbf16>, vector<64x32xbf16>, vector<8x32xf32> -> vector<8x32xf32>
    %138 = arith.addf %109, %137 : vector<8x32xf32>
    %c0_45 = arith.constant 0 : index
    %c0_46 = arith.constant 0 : index
    %c0_47 = arith.constant 0 : index
    %139 = vector.load %arg13[%c0_45, %c0_46, %c0_47] : memref<1x8x32xf32, #tpu.memory_space<vmem>>, vector<1x8x32xf32>
    %140 = vector.shape_cast %139 : vector<1x8x32xf32> to vector<8x32xf32>
    %141 = vector.shape_cast %138 : vector<8x32xf32> to vector<1x8x32xf32>
    tpu.vector_store %arg13[%c0_45, %c0_46, %c0_47], %141 {strides = array<i32>} : memref<1x8x32xf32, #tpu.memory_space<vmem>>, vector<1x8x32xf32>,
    return
  }
  func.func @transform_0(%arg0: i32) -> (i32, i32, i32) {
    %c0_i32 = arith.constant 0 : i32
    %c0_i32_0 = arith.constant 0 : i32
    %c0_i32_1 = arith.constant 0 : i32
    return %arg0, %c0_i32, %c0_i32_0 : i32, i32, i32
  }
  func.func @transform_1(%arg0: i32) -> (i32, i32) {
    %c0_i32 = arith.constant 0 : i32
    %c0_i32_0 = arith.constant 0 : i32
    %c0_i32_1 = arith.constant 0 : i32
    return %c0_i32, %c0_i32_0 : i32, i32
  }
  func.func @transform_2(%arg0: i32) -> (i32, i32) {
    %c0_i32 = arith.constant 0 : i32
    %c0_i32_0 = arith.constant 0 : i32
    %c0_i32_1 = arith.constant 0 : i32
    return %c0_i32, %c0_i32_0 : i32, i32
  }
  func.func @transform_3(%arg0: i32) -> (i32, i32) {
    %c0_i32 = arith.constant 0 : i32
    %c0_i32_0 = arith.constant 0 : i32
    %c0_i32_1 = arith.constant 0 : i32
    return %c0_i32, %c0_i32_0 : i32, i32
  }
  func.func @transform_4(%arg0: i32) -> (i32, i32) {
    %c0_i32 = arith.constant 0 : i32
    %c0_i32_0 = arith.constant 0 : i32
    %c0_i32_1 = arith.constant 0 : i32
    return %c0_i32, %c0_i32_0 : i32, i32
  }
  func.func @transform_5(%arg0: i32) -> (i32, i32) {
    %c0_i32 = arith.constant 0 : i32
    %c0_i32_0 = arith.constant 0 : i32
    %c0_i32_1 = arith.constant 0 : i32
    return %c0_i32, %c0_i32_0 : i32, i32
  }
  func.func @transform_6(%arg0: i32) -> (i32, i32) {
    %c0_i32 = arith.constant 0 : i32
    %c0_i32_0 = arith.constant 0 : i32
    %c0_i32_1 = arith.constant 0 : i32
    return %c0_i32, %c0_i32_0 : i32, i32
  }
  func.func @transform_7(%arg0: i32) -> (i32, i32) {
    %c0_i32 = arith.constant 0 : i32
    %c0_i32_0 = arith.constant 0 : i32
    %c0_i32_1 = arith.constant 0 : i32
    return %c0_i32, %c0_i32_0 : i32, i32
  }
  func.func @transform_8(%arg0: i32) -> (i32, i32) {
    %c0_i32 = arith.constant 0 : i32
    %c0_i32_0 = arith.constant 0 : i32
    %c0_i32_1 = arith.constant 0 : i32
    return %c0_i32, %c0_i32_0 : i32, i32
  }
  func.func @transform_9(%arg0: i32) -> (i32, i32) {
    %c0_i32 = arith.constant 0 : i32
    %c0_i32_0 = arith.constant 0 : i32
    %c0_i32_1 = arith.constant 0 : i32
    return %c0_i32, %c0_i32_0 : i32, i32
  }
  func.func @transform_10(%arg0: i32) -> (i32, i32) {
    %c0_i32 = arith.constant 0 : i32
    %c0_i32_0 = arith.constant 0 : i32
    %c0_i32_1 = arith.constant 0 : i32
    return %c0_i32, %c0_i32_0 : i32, i32
  }
  func.func @transform_11(%arg0: i32) -> (i32, i32) {
    %c0_i32 = arith.constant 0 : i32
    %c0_i32_0 = arith.constant 0 : i32
    %c0_i32_1 = arith.constant 0 : i32
    return %c0_i32, %c0_i32_0 : i32, i32
  }
  func.func @transform_12(%arg0: i32) -> (i32, i32, i32) {
    %c0_i32 = arith.constant 0 : i32
    %c0_i32_0 = arith.constant 0 : i32
    %c0_i32_1 = arith.constant 0 : i32
    return %arg0, %c0_i32, %c0_i32_0 : i32, i32, i32
  }
}

</mosaic_0001>

<llo_original>
// kernel: tpu_custom_call.1
$region0: #{tpu_custom_call.1}
  #allocation0 [shape = 'u32[]', space=smem, size = 0x4, offset = 0x4, fixed_abs, tag = 'smem constant byte address 0x4 - core index']
  #allocation1 [shape = 'u32[144,128]{1,0:T(1,128)}', space=vmem, size = 0x12000, scoped, tag = 'internal scratch']
  %s0 = inlined_call_operand.hbm [shape: bf16[2,8,32], index: 0, kind: input, shape index: {}]
  %s1 = inlined_call_operand.vmem [shape: bf16[32,96], index: 1, kind: input, shape index: {}]
  %s2 = inlined_call_operand.vmem [shape: bf16[32,32], index: 2, kind: input, shape index: {}]
  %s3 = inlined_call_operand.vmem [shape: bf16[32,64], index: 3, kind: input, shape index: {}]
  %s4 = inlined_call_operand.vmem [shape: bf16[64,32], index: 4, kind: input, shape index: {}]
  %s5 = inlined_call_operand.hbm [shape: bf16[32,64], index: 5, kind: input, shape index: {}]
  %s6 = inlined_call_operand.hbm [shape: f32[1,32], index: 6, kind: input, shape index: {}]
  %s7 = inlined_call_operand.hbm [shape: f32[1,32], index: 7, kind: input, shape index: {}]
  %s8 = inlined_call_operand.hbm [shape: f32[8,8], index: 8, kind: input, shape index: {}]
  %s9 = inlined_call_operand.vmem [shape: f32[8,8], index: 9, kind: input, shape index: {}]
  %s10 = inlined_call_operand.vmem [shape: s32[8,1], index: 10, kind: input, shape index: {}]
  %s11 = inlined_call_operand.vmem [shape: s32[1,8], index: 11, kind: input, shape index: {}]
  %s12 = inlined_call_operand.hbm [shape: f32[2,8,32], index: 12, kind: output, shape index: {}]
  %s13 = sld [smem:[#allocation0]]
  $region101: #{tpu_custom_call.1} parent=0
    _
  %s15 = ssub.s32 1, %s13
  %s16 = scalar_select 0, %s15, %s13
  $region1: #{tpu_custom_call.1} parent=0
    #allocation2 [shape = 'u8[4096]{0}', space=vmem, size = 0x1000, scoped, tag = 'input window, operand 0']
    #allocation3 [shape = 's32[2]{0}', space=sflag, size = 0x8, scoped, tag = 'scoped memory for tpu_custom_call.1']
    #allocation4 [shape = 's32[2]{0}', space=sflag, size = 0x8, scoped, tag = 'scoped memory for tpu_custom_call.1']
    #allocation5 [shape = 'u8[8192]{0}', space=vmem, size = 0x2000, scoped, tag = 'input window, operand 5, single buffered']
    #allocation6 [shape = 's32[1]{0}', space=sflag, size = 0x4, scoped, tag = 'scoped memory for tpu_custom_call.1']
    #allocation7 [shape = 'u8[512]{0}', space=vmem, size = 0x400, scoped, tag = 'input window, operand 6, single buffered']
    #allocation8 [shape = 'u8[512]{0}', space=vmem, size = 0x400, scoped, tag = 'input window, operand 7, single buffered']
    #allocation9 [shape = 's32[1]{0}', space=sflag, size = 0x4, scoped, tag = 'scoped memory for tpu_custom_call.1']
    #allocation10 [shape = 'u8[4096]{0}', space=vmem, size = 0x1000, scoped, tag = 'input window, operand 8, single buffered']
    #allocation11 [shape = 'u8[8192]{0}', space=vmem, size = 0x2000, scoped, tag = 'output window, operand 0']
    %17 = vsyncpa [#allocation3], 0
    %s18 = scalar_lea.sflag [#allocation3], 1
    %19 = vsyncpa %s18, 0
    %20 = vsyncpa [#allocation6], 0
    %21 = vsyncpa [#allocation9], 0
    %22 = vsyncpa [#allocation4], 0
    %s23 = scalar_lea.sflag [#allocation4], 1
    %24 = vsyncpa %s23, 0
    loop: start=0, step=1, limit=4
    $region2: #{tpu_custom_call.1} parent=1 // loop_pre_header
      _
    $region3: #{tpu_custom_call.1} parent=1 // loop_header
      %s26 = sphi 0, %s30
      %p27 = scmp.ge.s32.totalorder %s26, 4
      %s36 = sphi 0, %s38
      %s39 = sphi 0, %s36
      %s40 = sphi 0, %s39
      %s56 = sphi 0, %s40
      %s60 = sphi 0, %s60
      %s62 = sphi 0, %s60
      %s63 = sphi 0, %s62
      %s77 = sphi 0, %s63
      %s81 = sphi 0, %s81
      %s83 = sphi 0, %s81
      %s84 = sphi 0, %s83
      %s98 = sphi 0, %s84
      %s102 = sphi 0, %s102
      %s104 = sphi 0, %s102
      %s105 = sphi 0, %s104
      %s119 = sphi 0, %s105
      %s123 = sphi 0, %s123
      %s125 = sphi 0, %s123
      %s126 = sphi 0, %s125
      %s140 = sphi 0, %s126
      %s144 = sphi 0, %s144
      %s146 = sphi 0, %s144
      %s147 = sphi 0, %s146
      %s161 = sphi 0, %s147
      %s165 = sphi 0, %s165
      %s167 = sphi 0, %s165
      %s168 = sphi 0, %s167
      %s182 = sphi 0, %s168
      %s186 = sphi 0, %s186
      %s188 = sphi 0, %s186
      %s189 = sphi 0, %s188
      %s203 = sphi 0, %s189
      %s207 = sphi 0, %s207
      %s209 = sphi 0, %s207
      %s210 = sphi 0, %s209
      %s224 = sphi 0, %s210
      %s228 = sphi 0, %s228
      %s230 = sphi 0, %s228
      %s231 = sphi 0, %s230
      %s245 = sphi 0, %s231
      %s249 = sphi 0, %s249
      %s251 = sphi 0, %s249
      %s252 = sphi 0, %s251
      %s266 = sphi 0, %s252
      %s270 = sphi 0, %s270
      %s272 = sphi 0, %s270
      %s273 = sphi 0, %s272
      %s287 = sphi 0, %s273
      %s293 = sphi 0, %s295
      %s296 = sphi 0, %s293
      %s297 = sphi 0, %s296
      %s313 = sphi 0, %s297
    $region4: #{tpu_custom_call.1} parent=1 // loop_header_branch
      %29 = sbr.rel (%p27) target = $region8
    $region5: #{tpu_custom_call.1} parent=1 // loop_body
      %s31 = ssub.s32 %s26, 1
      %s32 = ssub.s32 %s26, 2
      %s33 = sadd.s32 %s26, 1
      %s34 = ssub.s32 %s26, %s33
      %p35 = scmp.eq.s32.totalorder %s34, 0
      %s37 = sadd.s32 %s36, 1
      %s38 = scalar_select %p35, %s36, %s37
      %p41 = pneg %p35
      %p42 = scmp.eq.s32.totalorder %s26, 1
      %p43 = por %p41, %p42
      %p44 = scmp.ne.s32.totalorder %s36, %s39
      %p45 = scmp.eq.s32.totalorder %s26, 0
      %p46 = por %p44, %p45
      %p47 = scmp.ne.s32.totalorder %s36, %s39
      %p48 = scmp.eq.s32.totalorder %s31, 1
      %p49 = por %p47, %p48
      %p50 = scmp.ne.s32.totalorder %s39, %s40
      %p51 = scmp.eq.s32.totalorder %s31, 0
      %p52 = por %p50, %p51
      %p53 = scmp.ne.s32.totalorder %s39, %s40
      %p54 = scmp.eq.s32.totalorder %s32, 1
      %p55 = por %p53, %p54
      %p57 = scmp.ne.s32.totalorder %s40, %s56
      %p58 = scmp.eq.s32.totalorder %s32, 0
      %p59 = por %p57, %p58
      %s61 = sadd.s32 %s60, 1
      %p64 = scmp.eq.s32.totalorder %s26, 1
      %p65 = scmp.ne.s32.totalorder %s60, %s62
      %p66 = scmp.eq.s32.totalorder %s26, 0
      %p67 = por %p65, %p66
      %p68 = scmp.ne.s32.totalorder %s60, %s62
      %p69 = scmp.eq.s32.totalorder %s31, 1
      %p70 = por %p68, %p69
      %p71 = scmp.ne.s32.totalorder %s62, %s63
      %p72 = scmp.eq.s32.totalorder %s31, 0
      %p73 = por %p71, %p72
      %p74 = scmp.ne.s32.totalorder %s62, %s63
      %p75 = scmp.eq.s32.totalorder %s32, 1
      %p76 = por %p74, %p75
      %p78 = scmp.ne.s32.totalorder %s63, %s77
      %p79 = scmp.eq.s32.totalorder %s32, 0
      %p80 = por %p78, %p79
      %s82 = sadd.s32 %s81, 1
      %p85 = scmp.eq.s32.totalorder %s26, 1
      %p86 = scmp.ne.s32.totalorder %s81, %s83
      %p87 = scmp.eq.s32.totalorder %s26, 0
      %p88 = por %p86, %p87
      %p89 = scmp.ne.s32.totalorder %s81, %s83
      %p90 = scmp.eq.s32.totalorder %s31, 1
      %p91 = por %p89, %p90
      %p92 = scmp.ne.s32.totalorder %s83, %s84
      %p93 = scmp.eq.s32.totalorder %s31, 0
      %p94 = por %p92, %p93
      %p95 = scmp.ne.s32.totalorder %s83, %s84
      %p96 = scmp.eq.s32.totalorder %s32, 1
      %p97 = por %p95, %p96
      %p99 = scmp.ne.s32.totalorder %s84, %s98
      %p100 = scmp.eq.s32.totalorder %s32, 0
      %p101 = por %p99, %p100
      %s103 = sadd.s32 %s102, 1
      %p106 = scmp.eq.s32.totalorder %s26, 1
      %p107 = scmp.ne.s32.totalorder %s102, %s104
      %p108 = scmp.eq.s32.totalorder %s26, 0
      %p109 = por %p107, %p108
      %p110 = scmp.ne.s32.totalorder %s102, %s104
      %p111 = scmp.eq.s32.totalorder %s31, 1
      %p112 = por %p110, %p111
      %p113 = scmp.ne.s32.totalorder %s104, %s105
      %p114 = scmp.eq.s32.totalorder %s31, 0
      %p115 = por %p113, %p114
      %p116 = scmp.ne.s32.totalorder %s104, %s105
      %p117 = scmp.eq.s32.totalorder %s32, 1
      %p118 = por %p116, %p117
      %p120 = scmp.ne.s32.totalorder %s105, %s119
      %p121 = scmp.eq.s32.totalorder %s32, 0
      %p122 = por %p120, %p121
      %s124 = sadd.s32 %s123, 1
      %p127 = scmp.eq.s32.totalorder %s26, 1
      %p128 = scmp.ne.s32.totalorder %s123, %s125
      %p129 = scmp.eq.s32.totalorder %s26, 0
      %p130 = por %p128, %p129
      %p131 = scmp.ne.s32.totalorder %s123, %s125
      %p132 = scmp.eq.s32.totalorder %s31, 1
      %p133 = por %p131, %p132
      %p134 = scmp.ne.s32.totalorder %s125, %s126
      %p135 = scmp.eq.s32.totalorder %s31, 0
      %p136 = por %p134, %p135
      %p137 = scmp.ne.s32.totalorder %s125, %s126
      %p138 = scmp.eq.s32.totalorder %s32, 1
      %p139 = por %p137, %p138
      %p141 = scmp.ne.s32.totalorder %s126, %s140
      %p142 = scmp.eq.s32.totalorder %s32, 0
      %p143 = por %p141, %p142
      %s145 = sadd.s32 %s144, 1
      %p148 = scmp.eq.s32.totalorder %s26, 1
      %p149 = scmp.ne.s32.totalorder %s144, %s146
      %p150 = scmp.eq.s32.totalorder %s26, 0
      %p151 = por %p149, %p150
      %p152 = scmp.ne.s32.totalorder %s144, %s146
      %p153 = scmp.eq.s32.totalorder %s31, 1
      %p154 = por %p152, %p153
      %p155 = scmp.ne.s32.totalorder %s146, %s147
      %p156 = scmp.eq.s32.totalorder %s31, 0
      %p157 = por %p155, %p156
      %p158 = scmp.ne.s32.totalorder %s146, %s147
      %p159 = scmp.eq.s32.totalorder %s32, 1
      %p160 = por %p158, %p159
      %p162 = scmp.ne.s32.totalorder %s147, %s161
      %p163 = scmp.eq.s32.totalorder %s32, 0
      %p164 = por %p162, %p163
      %s166 = sadd.s32 %s165, 1
      %p169 = scmp.eq.s32.totalorder %s26, 1
      %p170 = scmp.ne.s32.totalorder %s165, %s167
      %p171 = scmp.eq.s32.totalorder %s26, 0
      %p172 = por %p170, %p171
      %p173 = scmp.ne.s32.totalorder %s165, %s167
      %p174 = scmp.eq.s32.totalorder %s31, 1
      %p175 = por %p173, %p174
      %p176 = scmp.ne.s32.totalorder %s167, %s168
      %p177 = scmp.eq.s32.totalorder %s31, 0
      %p178 = por %p176, %p177
      %p179 = scmp.ne.s32.totalorder %s167, %s168
      %p180 = scmp.eq.s32.totalorder %s32, 1
      %p181 = por %p179, %p180
      %p183 = scmp.ne.s32.totalorder %s168, %s182
      %p184 = scmp.eq.s32.totalorder %s32, 0
      %p185 = por %p183, %p184
      %s187 = sadd.s32 %s186, 1
      %p190 = scmp.eq.s32.totalorder %s26, 1
      %p191 = scmp.ne.s32.totalorder %s186, %s188
      %p192 = scmp.eq.s32.totalorder %s26, 0
      %p193 = por %p191, %p192
      %p194 = scmp.ne.s32.totalorder %s186, %s188
      %p195 = scmp.eq.s32.totalorder %s31, 1
      %p196 = por %p194, %p195
      %p197 = scmp.ne.s32.totalorder %s188, %s189
      %p198 = scmp.eq.s32.totalorder %s31, 0
      %p199 = por %p197, %p198
      %p200 = scmp.ne.s32.totalorder %s188, %s189
      %p201 = scmp.eq.s32.totalorder %s32, 1
      %p202 = por %p200, %p201
      %p204 = scmp.ne.s32.totalorder %s189, %s203
      %p205 = scmp.eq.s32.totalorder %s32, 0
      %p206 = por %p204, %p205
      %s208 = sadd.s32 %s207, 1
      %p211 = scmp.eq.s32.totalorder %s26, 1
      %p212 = scmp.ne.s32.totalorder %s207, %s209
      %p213 = scmp.eq.s32.totalorder %s26, 0
      %p214 = por %p212, %p213
      %p215 = scmp.ne.s32.totalorder %s207, %s209
      %p216 = scmp.eq.s32.totalorder %s31, 1
      %p217 = por %p215, %p216
      %p218 = scmp.ne.s32.totalorder %s209, %s210
      %p219 = scmp.eq.s32.totalorder %s31, 0
      %p220 = por %p218, %p219
      %p221 = scmp.ne.s32.totalorder %s209, %s210
      %p222 = scmp.eq.s32.totalorder %s32, 1
      %p223 = por %p221, %p222
      %p225 = scmp.ne.s32.totalorder %s210, %s224
      %p226 = scmp.eq.s32.totalorder %s32, 0
      %p227 = por %p225, %p226
      %s229 = sadd.s32 %s228, 1
      %p232 = scmp.eq.s32.totalorder %s26, 1
      %p233 = scmp.ne.s32.totalorder %s228, %s230
      %p234 = scmp.eq.s32.totalorder %s26, 0
      %p235 = por %p233, %p234
      %p236 = scmp.ne.s32.totalorder %s228, %s230
      %p237 = scmp.eq.s32.totalorder %s31, 1
      %p238 = por %p236, %p237
      %p239 = scmp.ne.s32.totalorder %s230, %s231
      %p240 = scmp.eq.s32.totalorder %s31, 0
      %p241 = por %p239, %p240
      %p242 = scmp.ne.s32.totalorder %s230, %s231
      %p243 = scmp.eq.s32.totalorder %s32, 1
      %p244 = por %p242, %p243
      %p246 = scmp.ne.s32.totalorder %s231, %s245
      %p247 = scmp.eq.s32.totalorder %s32, 0
      %p248 = por %p246, %p247
      %s250 = sadd.s32 %s249, 1
      %p253 = scmp.eq.s32.totalorder %s26, 1
      %p254 = scmp.ne.s32.totalorder %s249, %s251
      %p255 = scmp.eq.s32.totalorder %s26, 0
      %p256 = por %p254, %p255
      %p257 = scmp.ne.s32.totalorder %s249, %s251
      %p258 = scmp.eq.s32.totalorder %s31, 1
      %p259 = por %p257, %p258
      %p260 = scmp.ne.s32.totalorder %s251, %s252
      %p261 = scmp.eq.s32.totalorder %s31, 0
      %p262 = por %p260, %p261
      %p263 = scmp.ne.s32.totalorder %s251, %s252
      %p264 = scmp.eq.s32.totalorder %s32, 1
      %p265 = por %p263, %p264
      %p267 = scmp.ne.s32.totalorder %s252, %s266
      %p268 = scmp.eq.s32.totalorder %s32, 0
      %p269 = por %p267, %p268
      %s271 = sadd.s32 %s270, 1
      %p274 = scmp.eq.s32.totalorder %s26, 1
      %p275 = scmp.ne.s32.totalorder %s270, %s272
      %p276 = scmp.eq.s32.totalorder %s26, 0
      %p277 = por %p275, %p276
      %p278 = scmp.ne.s32.totalorder %s270, %s272
      %p279 = scmp.eq.s32.totalorder %s31, 1
      %p280 = por %p278, %p279
      %p281 = scmp.ne.s32.totalorder %s272, %s273
      %p282 = scmp.eq.s32.totalorder %s31, 0
      %p283 = por %p281, %p282
      %p284 = scmp.ne.s32.totalorder %s272, %s273
      %p285 = scmp.eq.s32.totalorder %s32, 1
      %p286 = por %p284, %p285
      %p288 = scmp.ne.s32.totalorder %s273, %s287
      %p289 = scmp.eq.s32.totalorder %s32, 0
      %p290 = por %p288, %p289
      %s291 = ssub.s32 %s26, %s33
      %p292 = scmp.eq.s32.totalorder %s291, 0
      %s294 = sadd.s32 %s293, 1
      %s295 = scalar_select %p292, %s293, %s294
      %p298 = pneg %p292
      %p299 = scmp.eq.s32.totalorder %s26, 1
      %p300 = por %p298, %p299
      %p301 = scmp.ne.s32.totalorder %s293, %s296
      %p302 = scmp.eq.s32.totalorder %s26, 0
      %p303 = por %p301, %p302
      %p304 = scmp.ne.s32.totalorder %s293, %s296
      %p305 = scmp.eq.s32.totalorder %s31, 1
      %p306 = por %p304, %p305
      %p307 = scmp.ne.s32.totalorder %s296, %s297
      %p308 = scmp.eq.s32.totalorder %s31, 0
      %p309 = por %p307, %p308
      %p310 = scmp.ne.s32.totalorder %s296, %s297
      %p311 = scmp.eq.s32.totalorder %s32, 1
      %p312 = por %p310, %p311
      %p314 = scmp.ne.s32.totalorder %s297, %s313
      %p315 = scmp.eq.s32.totalorder %s32, 0
      %p316 = por %p314, %p315
      %p317 = scmp.le.s32.totalorder 1, %s26
      %p318 = scmp.lt.s32.totalorder %s26, 3
      %p319 = pnand %p317, %p318
      %p320 = pneg %p319
      // Predicated region
      $region9: #{tpu_custom_call.1} parent=5 // pred_check
        _
      $region10: #{tpu_custom_call.1} parent=5 // pred_check_branch
        %322 = sbr.rel (%p319) target = $region12
      $region11: #{tpu_custom_call.1} parent=5 // pred_region
        %s323 = ssub.s32 %s26, 1
        // Predicated region
        $region13: #{tpu_custom_call.1} parent=11 // pred_check
          %p324 = pneg %p73
        $region14: #{tpu_custom_call.1} parent=11 // pred_check_branch
          %326 = sbr.rel (%p324) target = $region16
        $region15: #{tpu_custom_call.1} parent=11 // pred_region
          _
        $region16: #{tpu_custom_call.1} parent=11 // pred_fallthru
          _
        // Predicated region
        $region17: #{tpu_custom_call.1} parent=11 // pred_check
          %p327 = pneg %p94
        $region18: #{tpu_custom_call.1} parent=11 // pred_check_branch
          %329 = sbr.rel (%p327) target = $region20
        $region19: #{tpu_custom_call.1} parent=11 // pred_region
          _
        $region20: #{tpu_custom_call.1} parent=11 // pred_fallthru
          _
        // Predicated region
        $region21: #{tpu_custom_call.1} parent=11 // pred_check
          %p330 = pneg %p115
        $region22: #{tpu_custom_call.1} parent=11 // pred_check_branch
          %332 = sbr.rel (%p330) target = $region24
        $region23: #{tpu_custom_call.1} parent=11 // pred_region
          _
        $region24: #{tpu_custom_call.1} parent=11 // pred_fallthru
          _
        // Predicated region
        $region25: #{tpu_custom_call.1} parent=11 // pred_check
          %p333 = pneg %p136
        $region26: #{tpu_custom_call.1} parent=11 // pred_check_branch
          %335 = sbr.rel (%p333) target = $region28
        $region27: #{tpu_custom_call.1} parent=11 // pred_region
          _
        $region28: #{tpu_custom_call.1} parent=11 // pred_fallthru
          _
        // Predicated region
        $region29: #{tpu_custom_call.1} parent=11 // pred_check
          %p336 = pneg %p157
        $region30: #{tpu_custom_call.1} parent=11 // pred_check_branch
          %338 = sbr.rel (%p336) target = $region32
        $region31: #{tpu_custom_call.1} parent=11 // pred_region
          %s340 = ssub.s32 256, 256
          %341 = vsyncadd [#allocation6], %s340
          %s342 = sshll.u32 [#allocation5], 4
          %s343 = int_to_ptr.vmem [resolvable:$true] %s342
          %348 = dma.hbm_to_vmem [thread:$0]  %s5, 256, %s343, [#allocation6], 64, 64, 4
        $region32: #{tpu_custom_call.1} parent=11 // pred_fallthru
          _
        // Predicated region
        $region33: #{tpu_custom_call.1} parent=11 // pred_check
          %p349 = pneg %p178
        $region34: #{tpu_custom_call.1} parent=11 // pred_check_branch
          %351 = sbr.rel (%p349) target = $region36
        $region35: #{tpu_custom_call.1} parent=11 // pred_region
          %s353 = ssub.s32 16, 16
          %354 = vsyncadd [#allocation6], %s353
          %s356 = sshll.u32 [#allocation7], 4
          %s357 = int_to_ptr.vmem [resolvable:$true] %s356
          %359 = dma.hbm_to_vmem [thread:$0]  %s6, 16, %s357, [#allocation6]
        $region36: #{tpu_custom_call.1} parent=11 // pred_fallthru
          _
        // Predicated region
        $region37: #{tpu_custom_call.1} parent=11 // pred_check
          %p360 = pneg %p199
        $region38: #{tpu_custom_call.1} parent=11 // pred_check_branch
          %362 = sbr.rel (%p360) target = $region40
        $region39: #{tpu_custom_call.1} parent=11 // pred_region
          %s364 = ssub.s32 16, 16
          %365 = vsyncadd [#allocation9], %s364
          %s367 = sshll.u32 [#allocation8], 4
          %s368 = int_to_ptr.vmem [resolvable:$true] %s367
          %370 = dma.hbm_to_vmem [thread:$0]  %s7, 16, %s368, [#allocation9]
        $region40: #{tpu_custom_call.1} parent=11 // pred_fallthru
          _
        // Predicated region
        $region41: #{tpu_custom_call.1} parent=11 // pred_check
          %p371 = pneg %p220
        $region42: #{tpu_custom_call.1} parent=11 // pred_check_branch
          %373 = sbr.rel (%p371) target = $region44
        $region43: #{tpu_custom_call.1} parent=11 // pred_region
          %s375 = ssub.s32 128, 128
          %376 = vsyncadd [#allocation9], %s375
          %s378 = sshll.u32 [#allocation10], 4
          %s379 = int_to_ptr.vmem [resolvable:$true] %s378
          %381 = dma.hbm_to_vmem [thread:$0]  %s8, 128, %s379, [#allocation9]
        $region44: #{tpu_custom_call.1} parent=11 // pred_fallthru
          _
        // Predicated region
        $region45: #{tpu_custom_call.1} parent=11 // pred_check
          %p382 = pneg %p241
        $region46: #{tpu_custom_call.1} parent=11 // pred_check_branch
          %384 = sbr.rel (%p382) target = $region48
        $region47: #{tpu_custom_call.1} parent=11 // pred_region
          _
        $region48: #{tpu_custom_call.1} parent=11 // pred_fallthru
          _
        // Predicated region
        $region49: #{tpu_custom_call.1} parent=11 // pred_check
          %p385 = pneg %p262
        $region50: #{tpu_custom_call.1} parent=11 // pred_check_branch
          %387 = sbr.rel (%p385) target = $region52
        $region51: #{tpu_custom_call.1} parent=11 // pred_region
          _
        $region52: #{tpu_custom_call.1} parent=11 // pred_fallthru
          _
        // Predicated region
        $region53: #{tpu_custom_call.1} parent=11 // pred_check
          %p388 = pneg %p283
        $region54: #{tpu_custom_call.1} parent=11 // pred_check_branch
          %390 = sbr.rel (%p388) target = $region56
        $region55: #{tpu_custom_call.1} parent=11 // pred_region
          _
        $region56: #{tpu_custom_call.1} parent=11 // pred_fallthru
          _
      $region12: #{tpu_custom_call.1} parent=5 // pred_fallthru
        _
      %p391 = scmp.lt.s32.totalorder %s26, 2
      // Predicated region
      $region57: #{tpu_custom_call.1} parent=5 // pred_check
        %p392 = pneg %p391
      $region58: #{tpu_custom_call.1} parent=5 // pred_check_branch
        %394 = sbr.rel (%p392) target = $region60
      $region59: #{tpu_custom_call.1} parent=5 // pred_region
        // Predicated region
        $region61: #{tpu_custom_call.1} parent=59 // pred_check
          %p395 = pneg %p46
        $region62: #{tpu_custom_call.1} parent=59 // pred_check_branch
          %397 = sbr.rel (%p395) target = $region64
        $region63: #{tpu_custom_call.1} parent=59 // pred_region
          %s398 = sand.u32 %s36, 1
          %s399 = scalar_lea.sflag [#allocation3], %s398
          %s400 = sand.u32 %s36, 1
          %s401 = smul.addr %s400, 4
          %s402 = scalar_lea.vmem [#allocation2], %s401
          %s404 = ssub.s32 64, 64
          %405 = vsyncadd %s399, %s404
          %s406 = smul.addr %s26, 64
          %s407 = scalar_lea.hbm %s0, %s406
          %s409 = sshll.u32 %s402, 4
          %s410 = int_to_ptr.vmem [resolvable:$true] %s409
          %412 = dma.hbm_to_vmem [thread:$0]  %s407, 64, %s410, %s399
        $region64: #{tpu_custom_call.1} parent=59 // pred_fallthru
          _
      $region60: #{tpu_custom_call.1} parent=5 // pred_fallthru
        _
      %p413 = scmp.le.s32.totalorder 1, %s26
      %p414 = scmp.lt.s32.totalorder %s26, 3
      %p415 = pnand %p413, %p414
      %p416 = pneg %p415
      // Predicated region
      $region65: #{tpu_custom_call.1} parent=5 // pred_check
        _
      $region66: #{tpu_custom_call.1} parent=5 // pred_check_branch
        %418 = sbr.rel (%p415) target = $region68
      $region67: #{tpu_custom_call.1} parent=5 // pred_region
        %s419 = ssub.s32 %s26, 1
        %s420 = sand.u32 %s39, 1
        %s421 = scalar_lea.sflag [#allocation3], %s420
        %s422 = sand.u32 %s39, 1
        %s423 = smul.addr %s422, 4
        %s424 = scalar_lea.vmem [#allocation2], %s423
        // Predicated region
        $region69: #{tpu_custom_call.1} parent=67 // pred_check
          %p425 = pneg %p52
        $region70: #{tpu_custom_call.1} parent=67 // pred_check_branch
          %427 = sbr.rel (%p425) target = $region72
        $region71: #{tpu_custom_call.1} parent=67 // pred_region
          %428 = dma.done %s421, 64
        $region72: #{tpu_custom_call.1} parent=67 // pred_fallthru
          _
        // Predicated region
        $region73: #{tpu_custom_call.1} parent=67 // pred_check
          %p429 = pneg %p157
        $region74: #{tpu_custom_call.1} parent=67 // pred_check_branch
          %431 = sbr.rel (%p429) target = $region76
        $region75: #{tpu_custom_call.1} parent=67 // pred_region
          %432 = dma.done [#allocation6], 256
        $region76: #{tpu_custom_call.1} parent=67 // pred_fallthru
          _
        // Predicated region
        $region77: #{tpu_custom_call.1} parent=67 // pred_check
          %p433 = pneg %p178
        $region78: #{tpu_custom_call.1} parent=67 // pred_check_branch
          %435 = sbr.rel (%p433) target = $region80
        $region79: #{tpu_custom_call.1} parent=67 // pred_region
          %436 = dma.done [#allocation6], 16
        $region80: #{tpu_custom_call.1} parent=67 // pred_fallthru
          _
        // Predicated region
        $region81: #{tpu_custom_call.1} parent=67 // pred_check
          %p437 = pneg %p199
        $region82: #{tpu_custom_call.1} parent=67 // pred_check_branch
          %439 = sbr.rel (%p437) target = $region84
        $region83: #{tpu_custom_call.1} parent=67 // pred_region
          %440 = dma.done [#allocation9], 16
        $region84: #{tpu_custom_call.1} parent=67 // pred_fallthru
          _
        // Predicated region
        $region85: #{tpu_custom_call.1} parent=67 // pred_check
          %p441 = pneg %p220
        $region86: #{tpu_custom_call.1} parent=67 // pred_check_branch
          %443 = sbr.rel (%p441) target = $region88
        $region87: #{tpu_custom_call.1} parent=67 // pred_region
          %444 = dma.done [#allocation9], 128
        $region88: #{tpu_custom_call.1} parent=67 // pred_fallthru
          _
        %s445 = sand.u32 %s39, 1
        %s446 = scalar_lea.sflag [#allocation3], %s445
        %s447 = sand.u32 %s39, 1
        %s448 = smul.addr %s447, 4
        %s449 = scalar_lea.vmem [#allocation2], %s448
        %p450 = pneg %p52
        %p451 = pneg %p49
        %p452 = pneg %p73
        %p453 = pneg %p70
        %p454 = pneg %p94
        %p455 = pneg %p91
        %p456 = pneg %p115
        %p457 = pneg %p112
        %p458 = pneg %p136
        %p459 = pneg %p133
        %p460 = pneg %p157
        %p461 = pneg %p154
        %p462 = pneg %p178
        %p463 = pneg %p175
        %p464 = pneg %p199
        %p465 = pneg %p196
        %p466 = pneg %p220
        %p467 = pneg %p217
        %p468 = pneg %p241
        %p469 = pneg %p238
        %p470 = pneg %p262
        %p471 = pneg %p259
        %p472 = pneg %p283
        %p473 = pneg %p280
        %p474 = pneg %p309
        %p475 = pneg %p306
        %s476 = sand.u32 %s296, 1
        %s477 = scalar_lea.sflag [#allocation4], %s476
        %s478 = sand.u32 %s296, 1
        %s479 = smul.addr %s478, 8
        %s480 = scalar_lea.vmem [#allocation11], %s479
        %v482 = vld [vmem:[%s424] sm:$0xf]
        %v483 = vunpack.c.l.bf16 %v482
        %v484 = vmul.f32 %v483, %v483
        %vm485 = vcmask 261120
        %v486 = vsel %vm485, %v484, 0.0
        %487 = vadd.xlane.f32.xlu0 %v486
        %v488 = vpop.xlane.xlu0 %487
        %v489 = vrcp.pop 32.0
        %v490 = vmul.f32 %v488, %v489
        %v491 = vadd.f32 %v490, 1e-05
        %v492 = vrsqrt.pop %v491
        %v493 = vmul.f32 %v483, %v492
        %v494 = vld [vmem:[#allocation7] sm:$0x1]
        %v496 = vlaneseq
        %v497 = vshrl.u32 %v496, 7
        %v498 = vsub.s32 0, %v497
        %v499 = vrot.slane %v494, %v498
        %v501 = vmul.f32 %v493, %v499
        %v502 = vpack.c.bf16 %v501, %v501
        %v503 = vld [vmem:[%s1] sm:$0xf]
        %v504 = vld [vmem:[%s1 + $0x4] sm:$0xf]
        %v505 = vld [vmem:[%s1 + $0x8] sm:$0xf]
        %v506 = vld [vmem:[%s1 + $0xc] sm:$0xf]
        %v511 = vunpack.c.l.b16 %v503
        %v512 = vunpack.c.l.b16 %v504
        %v513 = vunpack.c.l.b16 %v505
        %v514 = vunpack.c.l.b16 %v506
        %v515 = vpack.c.b16 %v512, %v511
        %v516 = vpack.c.b16 %v514, %v513
        %v520 = vsel %vm485, %v502, 0
        %522 = vmatprep.subr.bf16.mxu0 0
        %523 = vmatpush1.bf16.msra.mxu0 0
        %524 = vmatprep.subr.bf16.mxu0 0
        %525 = vmatpush1.bf16.msra.mxu0 0
        %526 = vmatprep.subr.bf16.mxu0 0
        %527 = vmatpush1.bf16.msra.mxu0 0
        %528 = vmatprep.subr.bf16.mxu0 0
        %529 = vmatpush1.bf16.msra.mxu0 0
        %530 = vmatprep.subr.bf16.mxu0 0
        %531 = vmatpush1.bf16.msra.mxu0 0
        %532 = vmatprep.subr.bf16.mxu0 0
        %533 = vmatpush1.bf16.msra.mxu0 0
        %534 = vmatprep.subr.bf16.mxu0 0
        %535 = vmatpush1.bf16.msra.mxu0 %v516
        %536 = vmatprep.subr.bf16.mxu0 0
        %537 = vmatpush1.bf16.msra.mxu0 %v515
        %538 = vmatprep.subr.bf16.mxu0 0
        %539 = vmatpush2.bf16.msra.mxu0 0
        %540 = vmatprep.subr.bf16.mxu0 0
        %541 = vmatpush2.bf16.msra.mxu0 0
        %542 = vmatprep.subr.bf16.mxu0 0
        %543 = vmatpush2.bf16.msra.mxu0 0
        %544 = vmatprep.subr.bf16.mxu0 0
        %545 = vmatpush2.bf16.msra.mxu0 0
        %546 = vmatprep.subr.bf16.mxu0 0
        %547 = vmatpush2.bf16.msra.mxu0 0
        %548 = vmatprep.subr.bf16.mxu0 0
        %549 = vmatpush2.bf16.msra.mxu0 0
        %550 = vmatprep.subr.bf16.mxu0 0
        %551 = vmatpush2.bf16.msra.mxu0 0
        %552 = vmatprep.subr.bf16.mxu0 0
        %553 = vmatpush2.bf16.msra.mxu0 0
        %554 = vmatprep.mubr.bf16.mxu0 0
        %555 = vmatmul.mubr.bf16.gmra.mxu0 %v520
        %v556 = vpop.f32.mrf.mxu0
        %v557 = vadd.f32 0.0, %v556
        %v558 = vpop.f32.mrf.mxu0
        %v559 = vpop.f32.mrf.mxu0
        %v560 = vpop.f32.mrf.mxu0
        %561 = vdwg.mxu0
        %v562 = vld [vmem:[#allocation10] sm:$0xff]
        %v563 = vld [vmem:[%s9] sm:$0xff]
        %v564 = vld [vmem:[%s10] sm:$0xff]
        %v565 = vld [vmem:[%s11] sm:$0x1]
        %566 = vset.pattern.permute.xlu0 0
        %567 = vperm.xlu0 %566, %v564
        %v568 = vpop.permute.xlu0 %567
        %v569 = vlaneseq
        %v570 = vshrl.u32 %v569, 7
        %v571 = vsub.s32 0, %v570
        %v572 = vrot.slane %v565, %v571
        %vm573 = vcmp.eq.s32.totalorder %v568, %v572
        %v574 = vmul.f32 %v557, %v562
        %576 = vrot.lane.b32.xlu0 %v563, 8
        %v577 = vpop.permute.xlu0 %576
        %v579 = vmul.f32 %v557, %v577
        %581 = vrot.lane.b32.xlu0 %v579, 120
        %v582 = vpop.permute.xlu0 %581
        %v584 = vsub.f32 %v574, %v582
        %v585 = vmul.f32 %v557, %v563
        %587 = vrot.lane.b32.xlu0 %v562, 8
        %v588 = vpop.permute.xlu0 %587
        %v590 = vmul.f32 %v557, %v588
        %592 = vrot.lane.b32.xlu0 %v590, 120
        %v593 = vpop.permute.xlu0 %592
        %v595 = vadd.f32 %v585, %v593
        %597 = vrot.lane.b32.xlu0 %v595, 8
        %v598 = vpop.permute.xlu0 %597
        %vm600 = vcmask 64512
        %v601 = vsel %vm600, %v584, %v598
        %602 = vrot.lane.b32.xlu0 %v562, 32
        %v603 = vpop.permute.xlu0 %602
        %v605 = vmul.f32 %v557, %v603
        %606 = vrot.lane.b32.xlu0 %v563, 40
        %v607 = vpop.permute.xlu0 %606
        %v609 = vmul.f32 %v557, %v607
        %611 = vrot.lane.b32.xlu0 %v609, 120
        %v612 = vpop.permute.xlu0 %611
        %v614 = vsub.f32 %v605, %v612
        %615 = vrot.lane.b32.xlu0 %v563, 32
        %v616 = vpop.permute.xlu0 %615
        %v618 = vmul.f32 %v557, %v616
        %619 = vrot.lane.b32.xlu0 %v562, 40
        %v620 = vpop.permute.xlu0 %619
        %v622 = vmul.f32 %v557, %v620
        %624 = vrot.lane.b32.xlu0 %v622, 120
        %v625 = vpop.permute.xlu0 %624
        %v627 = vadd.f32 %v618, %v625
        %629 = vrot.lane.b32.xlu0 %v614, 96
        %v630 = vpop.permute.xlu0 %629
        %633 = vrot.lane.b32.xlu0 %v627, 104
        %v634 = vpop.permute.xlu0 %633
        %v636 = vsel %vm600, %v630, %v634
        %v637 = vpack.c.bf16 %v601, %v601
        %v638 = vpack.c.bf16 %v636, %v636
        %vm639 = vcmask 130048
        %v641 = vsel %vm639, %v637, 0
        %v644 = vsel %vm639, %v638, 0
        %646 = vmatprep.subr.bf16.mxu0 0
        %647 = vmatpush1.bf16.xpose.msra.mxu0 0
        %648 = vmatprep.subr.bf16.mxu0 0
        %649 = vmatpush1.bf16.xpose.msra.mxu0 0
        %650 = vmatprep.subr.bf16.mxu0 0
        %651 = vmatpush1.bf16.xpose.msra.mxu0 0
        %652 = vmatprep.subr.bf16.mxu0 0
        %653 = vmatpush1.bf16.xpose.msra.mxu0 0
        %654 = vmatprep.subr.bf16.mxu0 0
        %655 = vmatpush1.bf16.xpose.msra.mxu0 0
        %656 = vmatprep.subr.bf16.mxu0 0
        %657 = vmatpush1.bf16.xpose.msra.mxu0 0
        %658 = vmatprep.subr.bf16.mxu0 0
        %659 = vmatpush1.bf16.xpose.msra.mxu0 0
        %660 = vmatprep.subr.bf16.mxu0 0
        %661 = vmatpush1.bf16.xpose.msra.mxu0 %v644
        %662 = vmatprep.subr.bf16.mxu0 0
        %663 = vmatpush2.bf16.xpose.msra.mxu0 0
        %664 = vmatprep.subr.bf16.mxu0 0
        %665 = vmatpush2.bf16.xpose.msra.mxu0 0
        %666 = vmatprep.subr.bf16.mxu0 0
        %667 = vmatpush2.bf16.xpose.msra.mxu0 0
        %668 = vmatprep.subr.bf16.mxu0 0
        %669 = vmatpush2.bf16.xpose.msra.mxu0 0
        %670 = vmatprep.subr.bf16.mxu0 0
        %671 = vmatpush2.bf16.xpose.msra.mxu0 0
        %672 = vmatprep.subr.bf16.mxu0 0
        %673 = vmatpush2.bf16.xpose.msra.mxu0 0
        %674 = vmatprep.subr.bf16.mxu0 0
        %675 = vmatpush2.bf16.xpose.msra.mxu0 0
        %676 = vmatprep.subr.bf16.mxu0 0
        %677 = vmatpush2.bf16.xpose.msra.mxu0 0
        %678 = vmatprep.mubr.bf16.mxu0 0
        %679 = vmatmul.mubr.bf16.gmra.mxu0 %v641
        %v680 = vpop.f32.mrf.mxu0
        %v681 = vadd.f32 0.0, %v680
        %v682 = vpop.f32.mrf.mxu0
        %v683 = vpop.f32.mrf.mxu0
        %v684 = vpop.f32.mrf.mxu0
        %685 = vdwg.mxu0
        %v686 = vsel %vm573, %v681, -1e+09
        %v687 = vsel %vm600, %v686, -inf
        %688 = vmax.xlane.f32.xlu0 %v687
        %v689 = vpop.xlane.xlu0 %688
        %v690 = vsub.f32 %v686, %v689
        %v691 = vmul.f32 %v690, 1.442695
        %v692 = vpow.pop %v691
        %v693 = vsel %vm600, %v692, 0.0
        %694 = vadd.xlane.f32.xlu0 %v693
        %v695 = vpop.xlane.xlu0 %694
        %v696 = vpack.c.bf16 %v692, %v692
        %v697 = vpack.c.bf16 %v557, %v557
        %699 = vrot.lane.b32.xlu0 %v697, 64
        %v700 = vpop.permute.xlu0 %699
        %v702 = vsel %vm600, %v696, 0
        %vm704 = vcmask 1043456
        %v706 = vsel %vm704, %v700, 0
        %708 = vmatprep.subr.bf16.mxu0 0
        %709 = vmatpush1.bf16.msra.mxu0 0
        %710 = vmatprep.subr.bf16.mxu0 0
        %711 = vmatpush1.bf16.msra.mxu0 0
        %712 = vmatprep.subr.bf16.mxu0 0
        %713 = vmatpush1.bf16.msra.mxu0 0
        %714 = vmatprep.subr.bf16.mxu0 0
        %715 = vmatpush1.bf16.msra.mxu0 0
        %716 = vmatprep.subr.bf16.mxu0 0
        %717 = vmatpush1.bf16.msra.mxu0 0
        %718 = vmatprep.subr.bf16.mxu0 0
        %719 = vmatpush1.bf16.msra.mxu0 0
        %720 = vmatprep.subr.bf16.mxu0 0
        %721 = vmatpush1.bf16.msra.mxu0 0
        %722 = vmatprep.subr.bf16.mxu0 0
        %723 = vmatpush1.bf16.msra.mxu0 %v706
        %724 = vmatprep.subr.bf16.mxu0 0
        %725 = vmatpush2.bf16.msra.mxu0 0
        %726 = vmatprep.subr.bf16.mxu0 0
        %727 = vmatpush2.bf16.msra.mxu0 0
        %728 = vmatprep.subr.bf16.mxu0 0
        %729 = vmatpush2.bf16.msra.mxu0 0
        %730 = vmatprep.subr.bf16.mxu0 0
        %731 = vmatpush2.bf16.msra.mxu0 0
        %732 = vmatprep.subr.bf16.mxu0 0
        %733 = vmatpush2.bf16.msra.mxu0 0
        %734 = vmatprep.subr.bf16.mxu0 0
        %735 = vmatpush2.bf16.msra.mxu0 0
        %736 = vmatprep.subr.bf16.mxu0 0
        %737 = vmatpush2.bf16.msra.mxu0 0
        %738 = vmatprep.subr.bf16.mxu0 0
        %739 = vmatpush2.bf16.msra.mxu0 0
        %740 = vmatprep.mubr.bf16.mxu0 0
        %741 = vmatmul.mubr.bf16.gmra.mxu0 %v702
        %v742 = vpop.f32.mrf.mxu0
        %v743 = vadd.f32 0.0, %v742
        %v744 = vpop.f32.mrf.mxu0
        %v745 = vpop.f32.mrf.mxu0
        %v746 = vpop.f32.mrf.mxu0
        %747 = vdwg.mxu0
        %v748 = vrcp.pop %v695
        %v749 = vmul.f32 %v743, %v748
        %v750 = vpack.c.bf16 %v749, %v749
        %751 = vrot.lane.b32.xlu0 %v562, 16
        %v752 = vpop.permute.xlu0 %751
        %v754 = vmul.f32 %v557, %v752
        %755 = vrot.lane.b32.xlu0 %v563, 24
        %v756 = vpop.permute.xlu0 %755
        %v758 = vmul.f32 %v557, %v756
        %760 = vrot.lane.b32.xlu0 %v758, 120
        %v761 = vpop.permute.xlu0 %760
        %v763 = vsub.f32 %v754, %v761
        %764 = vrot.lane.b32.xlu0 %v563, 16
        %v765 = vpop.permute.xlu0 %764
        %v767 = vmul.f32 %v557, %v765
        %768 = vrot.lane.b32.xlu0 %v562, 24
        %v769 = vpop.permute.xlu0 %768
        %v771 = vmul.f32 %v557, %v769
        %773 = vrot.lane.b32.xlu0 %v771, 120
        %v774 = vpop.permute.xlu0 %773
        %v776 = vadd.f32 %v767, %v774
        %778 = vrot.lane.b32.xlu0 %v763, 112
        %v779 = vpop.permute.xlu0 %778
        %782 = vrot.lane.b32.xlu0 %v776, 120
        %v783 = vpop.permute.xlu0 %782
        %v785 = vsel %vm600, %v779, %v783
        %786 = vrot.lane.b32.xlu0 %v562, 48
        %v787 = vpop.permute.xlu0 %786
        %v789 = vmul.f32 %v557, %v787
        %790 = vrot.lane.b32.xlu0 %v563, 56
        %v791 = vpop.permute.xlu0 %790
        %v793 = vmul.f32 %v557, %v791
        %795 = vrot.lane.b32.xlu0 %v793, 120
        %v796 = vpop.permute.xlu0 %795
        %v798 = vsub.f32 %v789, %v796
        %799 = vrot.lane.b32.xlu0 %v563, 48
        %v800 = vpop.permute.xlu0 %799
        %v802 = vmul.f32 %v557, %v800
        %803 = vrot.lane.b32.xlu0 %v562, 56
        %v804 = vpop.permute.xlu0 %803
        %v806 = vmul.f32 %v557, %v804
        %808 = vrot.lane.b32.xlu0 %v806, 120
        %v809 = vpop.permute.xlu0 %808
        %v811 = vadd.f32 %v802, %v809
        %813 = vrot.lane.b32.xlu0 %v798, 80
        %v814 = vpop.permute.xlu0 %813
        %817 = vrot.lane.b32.xlu0 %v811, 88
        %v818 = vpop.permute.xlu0 %817
        %v820 = vsel %vm600, %v814, %v818
        %v821 = vpack.c.bf16 %v785, %v785
        %v822 = vpack.c.bf16 %v820, %v820
        %v824 = vsel %vm639, %v821, 0
        %v827 = vsel %vm639, %v822, 0
        %829 = vmatprep.subr.bf16.mxu0 0
        %830 = vmatpush1.bf16.xpose.msra.mxu0 0
        %831 = vmatprep.subr.bf16.mxu0 0
        %832 = vmatpush1.bf16.xpose.msra.mxu0 0
        %833 = vmatprep.subr.bf16.mxu0 0
        %834 = vmatpush1.bf16.xpose.msra.mxu0 0
        %835 = vmatprep.subr.bf16.mxu0 0
        %836 = vmatpush1.bf16.xpose.msra.mxu0 0
        %837 = vmatprep.subr.bf16.mxu0 0
        %838 = vmatpush1.bf16.xpose.msra.mxu0 0
        %839 = vmatprep.subr.bf16.mxu0 0
        %840 = vmatpush1.bf16.xpose.msra.mxu0 0
        %841 = vmatprep.subr.bf16.mxu0 0
        %842 = vmatpush1.bf16.xpose.msra.mxu0 0
        %843 = vmatprep.subr.bf16.mxu0 0
        %844 = vmatpush1.bf16.xpose.msra.mxu0 %v827
        %845 = vmatprep.subr.bf16.mxu0 0
        %846 = vmatpush2.bf16.xpose.msra.mxu0 0
        %847 = vmatprep.subr.bf16.mxu0 0
        %848 = vmatpush2.bf16.xpose.msra.mxu0 0
        %849 = vmatprep.subr.bf16.mxu0 0
        %850 = vmatpush2.bf16.xpose.msra.mxu0 0
        %851 = vmatprep.subr.bf16.mxu0 0
        %852 = vmatpush2.bf16.xpose.msra.mxu0 0
        %853 = vmatprep.subr.bf16.mxu0 0
        %854 = vmatpush2.bf16.xpose.msra.mxu0 0
        %855 = vmatprep.subr.bf16.mxu0 0
        %856 = vmatpush2.bf16.xpose.msra.mxu0 0
        %857 = vmatprep.subr.bf16.mxu0 0
        %858 = vmatpush2.bf16.xpose.msra.mxu0 0
        %859 = vmatprep.subr.bf16.mxu0 0
        %860 = vmatpush2.bf16.xpose.msra.mxu0 0
        %861 = vmatprep.mubr.bf16.mxu0 0
        %862 = vmatmul.mubr.bf16.gmra.mxu0 %v824
        %v863 = vpop.f32.mrf.mxu0
        %v864 = vadd.f32 0.0, %v863
        %v865 = vpop.f32.mrf.mxu0
        %v866 = vpop.f32.mrf.mxu0
        %v867 = vpop.f32.mrf.mxu0
        %868 = vdwg.mxu0
        %v869 = vsel %vm573, %v864, -1e+09
        %v870 = vsel %vm600, %v869, -inf
        %871 = vmax.xlane.f32.xlu0 %v870
        %v872 = vpop.xlane.xlu0 %871
        %v873 = vsub.f32 %v869, %v872
        %v874 = vmul.f32 %v873, 1.442695
        %v875 = vpow.pop %v874
        %v876 = vsel %vm600, %v875, 0.0
        %877 = vadd.xlane.f32.xlu0 %v876
        %v878 = vpop.xlane.xlu0 %877
        %v879 = vpack.c.bf16 %v875, %v875
        %880 = vrot.lane.b32.xlu0 %v697, 48
        %v881 = vpop.permute.xlu0 %880
        %v883 = vsel %vm600, %v879, 0
        %v886 = vsel %vm704, %v881, 0
        %888 = vmatprep.subr.bf16.mxu0 0
        %889 = vmatpush1.bf16.msra.mxu0 0
        %890 = vmatprep.subr.bf16.mxu0 0
        %891 = vmatpush1.bf16.msra.mxu0 0
        %892 = vmatprep.subr.bf16.mxu0 0
        %893 = vmatpush1.bf16.msra.mxu0 0
        %894 = vmatprep.subr.bf16.mxu0 0
        %895 = vmatpush1.bf16.msra.mxu0 0
        %896 = vmatprep.subr.bf16.mxu0 0
        %897 = vmatpush1.bf16.msra.mxu0 0
        %898 = vmatprep.subr.bf16.mxu0 0
        %899 = vmatpush1.bf16.msra.mxu0 0
        %900 = vmatprep.subr.bf16.mxu0 0
        %901 = vmatpush1.bf16.msra.mxu0 0
        %902 = vmatprep.subr.bf16.mxu0 0
        %903 = vmatpush1.bf16.msra.mxu0 %v886
        %904 = vmatprep.subr.bf16.mxu0 0
        %905 = vmatpush2.bf16.msra.mxu0 0
        %906 = vmatprep.subr.bf16.mxu0 0
        %907 = vmatpush2.bf16.msra.mxu0 0
        %908 = vmatprep.subr.bf16.mxu0 0
        %909 = vmatpush2.bf16.msra.mxu0 0
        %910 = vmatprep.subr.bf16.mxu0 0
        %911 = vmatpush2.bf16.msra.mxu0 0
        %912 = vmatprep.subr.bf16.mxu0 0
        %913 = vmatpush2.bf16.msra.mxu0 0
        %914 = vmatprep.subr.bf16.mxu0 0
        %915 = vmatpush2.bf16.msra.mxu0 0
        %916 = vmatprep.subr.bf16.mxu0 0
        %917 = vmatpush2.bf16.msra.mxu0 0
        %918 = vmatprep.subr.bf16.mxu0 0
        %919 = vmatpush2.bf16.msra.mxu0 0
        %920 = vmatprep.mubr.bf16.mxu0 0
        %921 = vmatmul.mubr.bf16.gmra.mxu0 %v883
        %v922 = vpop.f32.mrf.mxu0
        %v923 = vadd.f32 0.0, %v922
        %v924 = vpop.f32.mrf.mxu0
        %v925 = vpop.f32.mrf.mxu0
        %v926 = vpop.f32.mrf.mxu0
        %927 = vdwg.mxu0
        %v928 = vrcp.pop %v878
        %v929 = vmul.f32 %v923, %v928
        %v930 = vpack.c.bf16 %v929, %v929
        %932 = vrot.lane.b32.xlu0 %v930, 16
        %v933 = vpop.permute.xlu0 %932
        %v936 = vsel %vm639, %v750, %v933
        %v937 = vld [vmem:[%s2] sm:$0xf]
        %v938 = vld [vmem:[%s2 + $0x4] sm:$0xf]
        %v939 = vld [vmem:[%s2 + $0x8] sm:$0xf]
        %v940 = vld [vmem:[%s2 + $0xc] sm:$0xf]
        %v945 = vunpack.c.l.b16 %v937
        %v946 = vunpack.c.l.b16 %v938
        %v947 = vunpack.c.l.b16 %v939
        %v948 = vunpack.c.l.b16 %v940
        %v949 = vpack.c.b16 %v946, %v945
        %v950 = vpack.c.b16 %v948, %v947
        %v953 = vsel %vm485, %v936, 0
        %955 = vmatprep.subr.bf16.mxu0 0
        %956 = vmatpush1.bf16.msra.mxu0 0
        %957 = vmatprep.subr.bf16.mxu0 0
        %958 = vmatpush1.bf16.msra.mxu0 0
        %959 = vmatprep.subr.bf16.mxu0 0
        %960 = vmatpush1.bf16.msra.mxu0 0
        %961 = vmatprep.subr.bf16.mxu0 0
        %962 = vmatpush1.bf16.msra.mxu0 0
        %963 = vmatprep.subr.bf16.mxu0 0
        %964 = vmatpush1.bf16.msra.mxu0 0
        %965 = vmatprep.subr.bf16.mxu0 0
        %966 = vmatpush1.bf16.msra.mxu0 0
        %967 = vmatprep.subr.bf16.mxu0 0
        %968 = vmatpush1.bf16.msra.mxu0 %v950
        %969 = vmatprep.subr.bf16.mxu0 0
        %970 = vmatpush1.bf16.msra.mxu0 %v949
        %971 = vmatprep.subr.bf16.mxu0 0
        %972 = vmatpush2.bf16.msra.mxu0 0
        %973 = vmatprep.subr.bf16.mxu0 0
        %974 = vmatpush2.bf16.msra.mxu0 0
        %975 = vmatprep.subr.bf16.mxu0 0
        %976 = vmatpush2.bf16.msra.mxu0 0
        %977 = vmatprep.subr.bf16.mxu0 0
        %978 = vmatpush2.bf16.msra.mxu0 0
        %979 = vmatprep.subr.bf16.mxu0 0
        %980 = vmatpush2.bf16.msra.mxu0 0
        %981 = vmatprep.subr.bf16.mxu0 0
        %982 = vmatpush2.bf16.msra.mxu0 0
        %983 = vmatprep.subr.bf16.mxu0 0
        %984 = vmatpush2.bf16.msra.mxu0 0
        %985 = vmatprep.subr.bf16.mxu0 0
        %986 = vmatpush2.bf16.msra.mxu0 0
        %987 = vmatprep.mubr.bf16.mxu0 0
        %988 = vmatmul.mubr.bf16.gmra.mxu0 %v953
        %v989 = vpop.f32.mrf.mxu0
        %v990 = vadd.f32 0.0, %v989
        %v991 = vpop.f32.mrf.mxu0
        %v992 = vpop.f32.mrf.mxu0
        %v993 = vpop.f32.mrf.mxu0
        %994 = vdwg.mxu0
        %v995 = vadd.f32 %v483, %v990
        %v996 = vmul.f32 %v995, %v995
        %v997 = vsel %vm485, %v996, 0.0
        %998 = vadd.xlane.f32.xlu0 %v997
        %v999 = vpop.xlane.xlu0 %998
        %v1000 = vmul.f32 %v999, %v489
        %v1001 = vadd.f32 %v1000, 1e-05
        %v1002 = vrsqrt.pop %v1001
        %v1003 = vmul.f32 %v995, %v1002
        %v1004 = vld [vmem:[#allocation8] sm:$0x1]
        %v1006 = vlaneseq
        %v1007 = vshrl.u32 %v1006, 7
        %v1008 = vsub.s32 0, %v1007
        %v1009 = vrot.slane %v1004, %v1008
        %v1011 = vmul.f32 %v1003, %v1009
        %v1012 = vpack.c.bf16 %v1011, %v1011
        %v1013 = vld [vmem:[%s3] sm:$0xf]
        %v1014 = vld [vmem:[%s3 + $0x4] sm:$0xf]
        %v1015 = vld [vmem:[%s3 + $0x8] sm:$0xf]
        %v1016 = vld [vmem:[%s3 + $0xc] sm:$0xf]
        %v1021 = vunpack.c.l.b16 %v1013
        %v1022 = vunpack.c.l.b16 %v1014
        %v1023 = vunpack.c.l.b16 %v1015
        %v1024 = vunpack.c.l.b16 %v1016
        %v1025 = vpack.c.b16 %v1022, %v1021
        %v1026 = vpack.c.b16 %v1024, %v1023
        %v1030 = vsel %vm485, %v1012, 0
        %1032 = vmatprep.subr.bf16.mxu0 0
        %1033 = vmatpush1.bf16.msra.mxu0 0
        %1034 = vmatprep.subr.bf16.mxu0 0
        %1035 = vmatpush1.bf16.msra.mxu0 0
        %1036 = vmatprep.subr.bf16.mxu0 0
        %1037 = vmatpush1.bf16.msra.mxu0 0
        %1038 = vmatprep.subr.bf16.mxu0 0
        %1039 = vmatpush1.bf16.msra.mxu0 0
        %1040 = vmatprep.subr.bf16.mxu0 0
        %1041 = vmatpush1.bf16.msra.mxu0 0
        %1042 = vmatprep.subr.bf16.mxu0 0
        %1043 = vmatpush1.bf16.msra.mxu0 0
        %1044 = vmatprep.subr.bf16.mxu0 0
        %1045 = vmatpush1.bf16.msra.mxu0 %v1026
        %1046 = vmatprep.subr.bf16.mxu0 0
        %1047 = vmatpush1.bf16.msra.mxu0 %v1025
        %1048 = vmatprep.subr.bf16.mxu0 0
        %1049 = vmatpush2.bf16.msra.mxu0 0
        %1050 = vmatprep.subr.bf16.mxu0 0
        %1051 = vmatpush2.bf16.msra.mxu0 0
        %1052 = vmatprep.subr.bf16.mxu0 0
        %1053 = vmatpush2.bf16.msra.mxu0 0
        %1054 = vmatprep.subr.bf16.mxu0 0
        %1055 = vmatpush2.bf16.msra.mxu0 0
        %1056 = vmatprep.subr.bf16.mxu0 0
        %1057 = vmatpush2.bf16.msra.mxu0 0
        %1058 = vmatprep.subr.bf16.mxu0 0
        %1059 = vmatpush2.bf16.msra.mxu0 0
        %1060 = vmatprep.subr.bf16.mxu0 0
        %1061 = vmatpush2.bf16.msra.mxu0 0
        %1062 = vmatprep.subr.bf16.mxu0 0
        %1063 = vmatpush2.bf16.msra.mxu0 0
        %1064 = vmatprep.mubr.bf16.mxu0 0
        %1065 = vmatmul.mubr.bf16.gmra.mxu0 %v1030
        %v1066 = vpop.f32.mrf.mxu0
        %v1067 = vadd.f32 0.0, %v1066
        %v1068 = vpop.f32.mrf.mxu0
        %v1069 = vpop.f32.mrf.mxu0
        %v1070 = vpop.f32.mrf.mxu0
        %1071 = vdwg.mxu0
        %v1072 = vld [vmem:[#allocation5] sm:$0xf]
        %v1073 = vld [vmem:[#allocation5 + $0x4] sm:$0xf]
        %v1074 = vld [vmem:[#allocation5 + $0x8] sm:$0xf]
        %v1075 = vld [vmem:[#allocation5 + $0xc] sm:$0xf]
        %v1080 = vunpack.c.l.b16 %v1072
        %v1081 = vunpack.c.l.b16 %v1073
        %v1082 = vunpack.c.l.b16 %v1074
        %v1083 = vunpack.c.l.b16 %v1075
        %v1084 = vpack.c.b16 %v1081, %v1080
        %v1085 = vpack.c.b16 %v1083, %v1082
        %1088 = vmatprep.subr.bf16.mxu0 0
        %1089 = vmatpush1.bf16.msra.mxu0 0
        %1090 = vmatprep.subr.bf16.mxu0 0
        %1091 = vmatpush1.bf16.msra.mxu0 0
        %1092 = vmatprep.subr.bf16.mxu0 0
        %1093 = vmatpush1.bf16.msra.mxu0 0
        %1094 = vmatprep.subr.bf16.mxu0 0
        %1095 = vmatpush1.bf16.msra.mxu0 0
        %1096 = vmatprep.subr.bf16.mxu0 0
        %1097 = vmatpush1.bf16.msra.mxu0 0
        %1098 = vmatprep.subr.bf16.mxu0 0
        %1099 = vmatpush1.bf16.msra.mxu0 0
        %1100 = vmatprep.subr.bf16.mxu0 0
        %1101 = vmatpush1.bf16.msra.mxu0 %v1085
        %1102 = vmatprep.subr.bf16.mxu0 0
        %1103 = vmatpush1.bf16.msra.mxu0 %v1084
        %1104 = vmatprep.subr.bf16.mxu0 0
        %1105 = vmatpush2.bf16.msra.mxu0 0
        %1106 = vmatprep.subr.bf16.mxu0 0
        %1107 = vmatpush2.bf16.msra.mxu0 0
        %1108 = vmatprep.subr.bf16.mxu0 0
        %1109 = vmatpush2.bf16.msra.mxu0 0
        %1110 = vmatprep.subr.bf16.mxu0 0
        %1111 = vmatpush2.bf16.msra.mxu0 0
        %1112 = vmatprep.subr.bf16.mxu0 0
        %1113 = vmatpush2.bf16.msra.mxu0 0
        %1114 = vmatprep.subr.bf16.mxu0 0
        %1115 = vmatpush2.bf16.msra.mxu0 0
        %1116 = vmatprep.subr.bf16.mxu0 0
        %1117 = vmatpush2.bf16.msra.mxu0 0
        %1118 = vmatprep.subr.bf16.mxu0 0
        %1119 = vmatpush2.bf16.msra.mxu0 0
        %1120 = vmatprep.mubr.bf16.mxu0 0
        %1121 = vmatmul.mubr.bf16.gmra.mxu0 %v1030
        %v1122 = vpop.f32.mrf.mxu0
        %v1123 = vadd.f32 0.0, %v1122
        %v1124 = vpop.f32.mrf.mxu0
        %v1125 = vpop.f32.mrf.mxu0
        %v1126 = vpop.f32.mrf.mxu0
        %1127 = vdwg.mxu0
        %v1128 = vxor.u32 %v1067, 2147483648
        %v1129 = vmul.f32 %v1128, 1.442695
        %v1130 = vpow.pop %v1129
        %v1131 = vadd.f32 %v1130, 1.0
        %v1132 = vrcp.pop %v1131
        %v1133 = vmul.f32 1.0, %v1132
        %v1134 = vmul.f32 %v1067, %v1133
        %v1135 = vmul.f32 %v1134, %v1123
        %v1136 = vpack.c.bf16 %v1135, %v1135
        %v1137 = vld [vmem:[%s4] sm:$0xf]
        %v1138 = vld [vmem:[%s4 + $0x4] sm:$0xf]
        %v1139 = vld [vmem:[%s4 + $0x8] sm:$0xf]
        %v1140 = vld [vmem:[%s4 + $0xc] sm:$0xf]
        %v1141 = vld [vmem:[%s4 + $0x10] sm:$0xf]
        %v1142 = vld [vmem:[%s4 + $0x14] sm:$0xf]
        %v1143 = vld [vmem:[%s4 + $0x18] sm:$0xf]
        %v1144 = vld [vmem:[%s4 + $0x1c] sm:$0xf]
        %v1153 = vunpack.c.l.b16 %v1137
        %v1154 = vunpack.c.l.b16 %v1138
        %v1155 = vunpack.c.l.b16 %v1139
        %v1156 = vunpack.c.l.b16 %v1140
        %v1157 = vunpack.c.l.b16 %v1141
        %v1158 = vunpack.c.l.b16 %v1142
        %v1159 = vunpack.c.l.b16 %v1143
        %v1160 = vunpack.c.l.b16 %v1144
        %v1161 = vpack.c.b16 %v1154, %v1153
        %v1162 = vpack.c.b16 %v1156, %v1155
        %v1163 = vpack.c.b16 %v1158, %v1157
        %v1164 = vpack.c.b16 %v1160, %v1159
        %vm1169 = vcmask 523264
        %v1171 = vsel %vm1169, %v1136, 0
        %1173 = vmatprep.subr.bf16.mxu0 0
        %1174 = vmatpush1.bf16.msra.mxu0 0
        %1175 = vmatprep.subr.bf16.mxu0 0
        %1176 = vmatpush1.bf16.msra.mxu0 0
        %1177 = vmatprep.subr.bf16.mxu0 0
        %1178 = vmatpush1.bf16.msra.mxu0 0
        %1179 = vmatprep.subr.bf16.mxu0 0
        %1180 = vmatpush1.bf16.msra.mxu0 0
        %1181 = vmatprep.subr.bf16.mxu0 0
        %1182 = vmatpush1.bf16.msra.mxu0 %v1164
        %1183 = vmatprep.subr.bf16.mxu0 0
        %1184 = vmatpush1.bf16.msra.mxu0 %v1163
        %1185 = vmatprep.subr.bf16.mxu0 0
        %1186 = vmatpush1.bf16.msra.mxu0 %v1162
        %1187 = vmatprep.subr.bf16.mxu0 0
        %1188 = vmatpush1.bf16.msra.mxu0 %v1161
        %1189 = vmatprep.subr.bf16.mxu0 0
        %1190 = vmatpush2.bf16.msra.mxu0 0
        %1191 = vmatprep.subr.bf16.mxu0 0
        %1192 = vmatpush2.bf16.msra.mxu0 0
        %1193 = vmatprep.subr.bf16.mxu0 0
        %1194 = vmatpush2.bf16.msra.mxu0 0
        %1195 = vmatprep.subr.bf16.mxu0 0
        %1196 = vmatpush2.bf16.msra.mxu0 0
        %1197 = vmatprep.subr.bf16.mxu0 0
        %1198 = vmatpush2.bf16.msra.mxu0 0
        %1199 = vmatprep.subr.bf16.mxu0 0
        %1200 = vmatpush2.bf16.msra.mxu0 0
        %1201 = vmatprep.subr.bf16.mxu0 0
        %1202 = vmatpush2.bf16.msra.mxu0 0
        %1203 = vmatprep.subr.bf16.mxu0 0
        %1204 = vmatpush2.bf16.msra.mxu0 0
        %1205 = vmatprep.mubr.bf16.mxu0 0
        %1206 = vmatmul.mubr.bf16.gmra.mxu0 %v1171
        %v1207 = vpop.f32.mrf.mxu0
        %v1208 = vadd.f32 0.0, %v1207
        %v1209 = vpop.f32.mrf.mxu0
        %v1210 = vpop.f32.mrf.mxu0
        %v1211 = vpop.f32.mrf.mxu0
        %1212 = vdwg.mxu0
        %v1213 = vadd.f32 %v995, %v1208
        %1214 = vst.msk [vmem:[%s480] sm:$0xff] %vm485, %v1213
        %s1215 = sand.u32 %s296, 1
        %s1216 = scalar_lea.sflag [#allocation4], %s1215
        %s1217 = sand.u32 %s296, 1
        %s1218 = smul.addr %s1217, 8
        %s1219 = scalar_lea.vmem [#allocation11], %s1218
        // Predicated region
        $region89: #{tpu_custom_call.1} parent=67 // pred_check
          %p1220 = pneg %p306
        $region90: #{tpu_custom_call.1} parent=67 // pred_check_branch
          %1222 = sbr.rel (%p1220) target = $region92
        $region91: #{tpu_custom_call.1} parent=67 // pred_region
          %s1224 = ssub.s32 128, 128
          %1225 = vsyncadd %s1216, %s1224
          %s1226 = smul.addr %s31, 128
          %s1227 = scalar_lea.hbm %s12, %s1226
          %s1229 = sshll.u32 %s1219, 4
          %s1230 = int_to_ptr.vmem [resolvable:$true] %s1229
          %1232 = dma.vmem_to_hbm [thread:$0]  %s1230, 128, %s1227, %s1216
        $region92: #{tpu_custom_call.1} parent=67 // pred_fallthru
          _
      $region68: #{tpu_custom_call.1} parent=5 // pred_fallthru
        _
      %p1233 = scmp.le.s32.totalorder 2, %s26
      // Predicated region
      $region93: #{tpu_custom_call.1} parent=5 // pred_check
        %p1234 = pneg %p1233
      $region94: #{tpu_custom_call.1} parent=5 // pred_check_branch
        %1236 = sbr.rel (%p1234) target = $region96
      $region95: #{tpu_custom_call.1} parent=5 // pred_region
        %s1237 = ssub.s32 %s26, 2
        // Predicated region
        $region97: #{tpu_custom_call.1} parent=95 // pred_check
          %p1238 = pneg %p312
        $region98: #{tpu_custom_call.1} parent=95 // pred_check_branch
          %1240 = sbr.rel (%p1238) target = $region100
        $region99: #{tpu_custom_call.1} parent=95 // pred_region
          %s1241 = sand.u32 %s297, 1
          %s1242 = scalar_lea.sflag [#allocation4], %s1241
          %s1243 = sand.u32 %s297, 1
          %s1244 = smul.addr %s1243, 8
          %s1245 = scalar_lea.vmem [#allocation11], %s1244
          %1246 = dma.done %s1242, 128
        $region100: #{tpu_custom_call.1} parent=95 // pred_fallthru
          _
      $region96: #{tpu_custom_call.1} parent=5 // pred_fallthru
        _
    $region6: #{tpu_custom_call.1} parent=1 // loop_footer
      %s30 = sadd.s32 1, %s26
    $region7: #{tpu_custom_call.1} parent=1 // loop_footer_branch
      %25 = sbr.rel target = $region3
    $region8: #{tpu_custom_call.1} parent=1 // loop_exit
      _
    %1247 = vsyncpa [#allocation3], 1
    %s1248 = scalar_lea.sflag [#allocation3], 1
    %1249 = vsyncpa %s1248, 1
    %1250 = vsyncpa [#allocation6], 1
    %1251 = vsyncpa [#allocation9], 1
    %1252 = vsyncpa [#allocation4], 1
    %s1253 = scalar_lea.sflag [#allocation4], 1
    %1254 = vsyncpa %s1253, 1

</llo_original>
